<compile_context>
chip_gen: v7x
topology: tpu7x:2x2x1
jax: 0.10.0
libtpu: 0.0.40
codegen_flags: <defaults>
</compile_context>

<pallas_src>
import functools

import jax
import jax.numpy as jnp
from jax import lax
from jax.experimental import pallas as pl
from jax.experimental.pallas import tpu as pltpu


# ----------------------------------------------------------------------------
# Fused conv3x3 + bias + ReLU (+ optional 2x2 max-pool) kernel
# ----------------------------------------------------------------------------
def _conv3x3_relu_kernel(x_ref, xh_ref, w_ref, b_ref, o_ref, *, pool):
    """One (batch, time-tile) block.

    x_ref : (1, Ht, W+2, Cin)   main Ht rows of the spatially padded input (bf16)
    xh_ref: (1, 2,  W+2, Cin)   2-row bottom halo of the same padded input (bf16)
    w_ref : (3, 3*Cin, Cout)    weights with the 3 dw taps folded into K (bf16)
    b_ref : (1, Cout)           bias (f32)
    o_ref : (1, Ho, Wo, Cout)   bf16 output tile (pooled or full resolution)
    """
    Ht, Wp2, Cin = x_ref.shape[1], x_ref.shape[2], x_ref.shape[3]
    W = Wp2 - 2
    Cout = o_ref.shape[3]

    xm = x_ref[0]      # (Ht, W+2, Cin)
    xh = xh_ref[0]     # (2,  W+2, Cin)

    # im2col over the freq (dw) axis only: 3 shifted slices concatenated on the
    # channel (lane) axis -> contraction depth K = 3*Cin per dh tap.
    def dw_cat(a):
        return jnp.concatenate(
            [a[:, 0:W, :], a[:, 1:W + 1, :], a[:, 2:W + 2, :]], axis=-1)

    cols = jnp.concatenate([dw_cat(xm), dw_cat(xh)], axis=0)   # (Ht+2, W, 3Cin)

    acc = None
    for dh in range(3):                      # 3 MXU matmuls, f32 accumulation
        patch = cols[dh:dh + Ht].reshape(Ht * W, 3 * Cin)
        d = jnp.dot(patch, w_ref[dh], preferred_element_type=jnp.float32)
        acc = d if acc is None else acc + d

    y = jnp.maximum(acc + b_ref[...], 0.0)                     # f32 epilogue
    y = y.reshape(Ht, W, Cout)
    if pool:
        Ho, Wo = Ht // 2, W // 2
        y = y[:2 * Ho, :2 * Wo, :].reshape(Ho, 2, Wo, 2, Cout)
        y = jnp.max(y, axis=(1, 3))                            # floor-mode pool
    o_ref[0] = y.astype(o_ref.dtype)


# ----------------------------------------------------------------------------
# pallas_call wrapper: grid over (batch, time tiles), 2-row halo on time
# ----------------------------------------------------------------------------
def _pick_time_tile(H, W, cin, cout, budget_bytes=12 * 1024 * 1024):
    """Largest even time tile whose per-tile working set fits the budget."""
    per_row = (W + 2) * cin * 2 * 4           # bf16 input tile + im2col copies
    per_row += W * cout * (4 * 2 + 2 * 2)     # f32 acc/dot + bf16 out (dbl buf)
    ht = int(budget_bytes // max(per_row, 1))
    ht = max(2, min(ht, H, 512))
    if ht % 2:
        ht -= 1
    return ht


def conv3x3_relu(x, w, b, *, pool=False, time_tile=None):
    """Fused 3x3 SAME conv + bias + ReLU (+ optional 2x2/stride-2 max-pool).

    x: (N, H, W, Cin) bf16 (H even), w: (3, 3, Cin, Cout) bf16, b: (Cout,) f32.
    Returns (N, H or H//2, W or W//2, Cout) in x.dtype.
    """
    N, H, W, Cin = x.shape
    Cout = w.shape[-1]

    Htile = _pick_time_tile(H, W, Cin, Cout) if time_tile is None else time_tile
    Htile = max(2, min(int(Htile), H))
    if Htile % 2:
        Htile -= 1
    T = int(pl.cdiv(H, Htile))
    Ht = T * Htile

    # SAME pad on both spatial axes + zero rows so time is a multiple of Htile.
    # TODO(synk): this per-stage jnp.pad still costs one HBM round-trip of the
    # activation; masking the boundary taps in-kernel would remove it.
    xp = jnp.pad(x, ((0, 0), (1, Ht - H + 1), (1, 1), (0, 0)))

    w_r = w.reshape(3, 3 * Cin, Cout)               # fold dw taps into K
    b_r = b.reshape(1, Cout).astype(jnp.float32)

    Ho_t = Htile // 2 if pool else Htile
    Wo = W // 2 if pool else W
    Ho = Ht // 2 if pool else Ht

    out = pl.pallas_call(
        functools.partial(_conv3x3_relu_kernel, pool=pool),
        out_shape=jax.ShapeDtypeStruct((N, Ho, Wo, Cout), x.dtype),
        grid=(N, T),
        in_specs=[
            # main Htile rows of the padded input
            pl.BlockSpec((1, Htile, W + 2, Cin), lambda n, t: (n, t, 0, 0)),
            # 2-row bottom halo (block units of 2 rows; Htile is even)
            pl.BlockSpec((1, 2, W + 2, Cin),
                         lambda n, t: (n, (t + 1) * (Htile // 2), 0, 0)),
            pl.BlockSpec((3, 3 * Cin, Cout), lambda n, t: (0, 0, 0)),
            pl.BlockSpec((1, Cout), lambda n, t: (0, 0)),
        ],
        out_specs=pl.BlockSpec((1, Ho_t, Wo, Cout), lambda n, t: (n, t, 0, 0)),
        compiler_params=pltpu.CompilerParams(
            dimension_semantics=("parallel", "parallel"),
            vmem_limit_bytes=48 * 1024 * 1024),
    )(xp, xp, w_r, b_r)

    real_rows = (H // 2) if pool else H
    if Ho != real_rows:                 # drop the time-alignment pad rows
        out = out[:, :real_rows]
    return out


# ----------------------------------------------------------------------------
# VGGExtractor module (parameters + forward)
# ----------------------------------------------------------------------------
class VGGExtractorPallas:
    """VGG extractor for ASR (https://arxiv.org/pdf/1706.02737.pdf)."""

    def __init__(self, init_dim=64, hide_dim=128, input_dim=80, key=None):
        self.init_dim = init_dim
        self.hide_dim = hide_dim
        self.in_channel, self.freq_dim, self.output_dim = self._check_dim(input_dim)

        key = jax.random.PRNGKey(0) if key is None else key
        ks = jax.random.split(key, 8)

        def winit(k, shape):
            return (jax.random.normal(k, shape, jnp.float32) * 0.1).astype(jnp.bfloat16)

        def binit(k, cout):
            return jax.random.normal(k, (cout,), jnp.float32) * 0.01

        c_in, c1, c2 = self.in_channel, init_dim, hide_dim
        # HWIO weights stored in bf16 (MXU operands); biases kept in f32.
        self.w1, self.b1 = winit(ks[0], (3, 3, c_in, c1)), binit(ks[1], c1)
        self.w2, self.b2 = winit(ks[2], (3, 3, c1, c1)),   binit(ks[3], c1)
        self.w3, self.b3 = winit(ks[4], (3, 3, c1, c2)),   binit(ks[5], c2)
        self.w4, self.b4 = winit(ks[6], (3, 3, c2, c2)),   binit(ks[7], c2)

    def _check_dim(self, input_dim):
        if input_dim % 13 == 0:
            return int(input_dim / 13), 13, 13 // 4 * self.hide_dim
        elif input_dim % 40 == 0:
            return int(input_dim / 40), 40, 40 // 4 * self.hide_dim
        else:
            raise ValueError("Acoustic feature dimension for VGG should be "
                             "13/26/39(MFCC) or 40/80/120(Fbank) but got "
                             + str(input_dim))

    def view_input(self, feature, feat_len):
        feat_len = feat_len // 4
        ts = feature.shape[1]
        if ts % 4 != 0:
            feature = feature[:, :-(ts % 4), :]
        bs, ts, _ = feature.shape
        # torch: (bs, ts, C, F) -> transpose(1,2) -> NCHW (bs, C, ts, F)
        # ours:  NHWC (bs, ts, F, C)  (H=time, W=freq, channels last)
        x = feature.reshape(bs, ts, self.in_channel, self.freq_dim)
        x = jnp.transpose(x, (0, 1, 3, 2))
        return x, feat_len

    def __call__(self, feature, feat_len):
        x, feat_len = self.view_input(feature, feat_len)
        x = x.astype(jnp.bfloat16)
        x = conv3x3_relu(x, self.w1, self.b1, pool=False)   # conv1 + relu
        x = conv3x3_relu(x, self.w2, self.b2, pool=True)    # conv2 + relu + pool
        x = conv3x3_relu(x, self.w3, self.b3, pool=False)   # conv3 + relu
        x = conv3x3_relu(x, self.w4, self.b4, pool=True)    # conv4 + relu + pool
        # x: (bs, T', F', C). Torch does NCHW.transpose(1,2) -> (bs, T', C, F')
        # then .view(bs, T', C*F'), i.e. flatten channel-major.
        x = jnp.transpose(x, (0, 1, 3, 2))                   # (bs, T', C, F')
        bs, tp = x.shape[0], x.shape[1]
        out = x.reshape(bs, tp, self.output_dim).astype(jnp.float32)
        return out, feat_len


# ----------------------------------------------------------------------------
# Pure-JAX reference (same bf16 operand / f32 accumulation discipline)
# ----------------------------------------------------------------------------
def _ref_conv_relu(x, w, b):
    y = lax.conv_general_dilated(
        x, w, window_strides=(1, 1), padding="SAME",
        dimension_numbers=("NHWC", "HWIO", "NHWC"),
        preferred_element_type=jnp.float32)
    return jnp.maximum(y + b.astype(jnp.float32), 0.0).astype(jnp.bfloat16)


def _ref_pool(x):
    N, H, W, C = x.shape
    x = x[:, :H // 2 * 2, :W // 2 * 2, :]
    return x.reshape(N, H // 2, 2, W // 2, 2, C).max(axis=(2, 4))


def _ref_forward(mod, feature, feat_len):
    x, feat_len = mod.view_input(feature, feat_len)
    x = x.astype(jnp.bfloat16)
    x = _ref_conv_relu(x, mod.w1, mod.b1)
    x = _ref_pool(_ref_conv_relu(x, mod.w2, mod.b2))
    x = _ref_conv_relu(x, mod.w3, mod.b3)
    x = _ref_pool(_ref_conv_relu(x, mod.w4, mod.b4))
    x = jnp.transpose(x, (0, 1, 3, 2))
    out = x.reshape(x.shape[0], x.shape[1], mod.output_dim).astype(jnp.float32)
    return out, feat_len


# ----------------------------------------------------------------------------
if __name__ == "__main__":
    key = jax.random.PRNGKey(0)
    k_feat, k_params, k_x, k_w, k_b = jax.random.split(key, 5)

    # --- direct multi-tile check of the fused conv+pool kernel --------------
    # Force a tiny time tile (4 rows) so T > 1 exercises the halo BlockSpecs.
    xt = jax.random.normal(k_x, (2, 16, 13, 8), jnp.float32).astype(jnp.bfloat16)
    wt = (jax.random.normal(k_w, (3, 3, 8, 16), jnp.float32) * 0.1).astype(jnp.bfloat16)
    bt = jax.random.normal(k_b, (16,), jnp.float32) * 0.01
    got = jax.block_until_ready(conv3x3_relu(xt, wt, bt, pool=True, time_tile=4))
    want = _ref_pool(_ref_conv_relu(xt, wt, bt))
    assert got.shape == want.shape, (got.shape, want.shape)
    assert jnp.allclose(got.astype(jnp.float32), want.astype(jnp.float32),
                        atol=5e-2, rtol=5e-2)

    # --- full module forward (small shapes: input_dim=13 -> Cin=1, F=13) ----
    bs, ts, input_dim = 2, 8, 13
    init_dim, hide_dim = 8, 16
    feature = jax.random.normal(k_feat, (bs, ts, input_dim), jnp.float32)
    feat_len = jnp.array([8, 6], dtype=jnp.int32)

    mod = VGGExtractorPallas(init_dim=init_dim, hide_dim=hide_dim,
                             input_dim=input_dim, key=k_params)
    out, out_len = mod(feature, feat_len)
    out = jax.block_until_ready(out)
    out_len = jax.block_until_ready(out_len)

    ref_out, ref_len = _ref_forward(mod, feature, feat_len)
    assert out.shape == (bs, ts // 4, mod.output_dim), out.shape
    assert bool(jnp.all(out_len == ref_len))
    assert jnp.allclose(out, ref_out, atol=5e-2, rtol=5e-2)

    print("KERNEL_OK")
</pallas_src>

<mosaic_0001>
module attributes {stable_mosaic.version = 11 : i64} {
  func.func @_conv3x3_relu_kernel(%arg0: i32, %arg1: i32, %arg2: memref<1x4x15x8xbf16, #tpu.memory_space<vmem>>, %arg3: memref<1x2x15x8xbf16, #tpu.memory_space<vmem>>, %arg4: memref<3x24x16xbf16, #tpu.memory_space<vmem>>, %arg5: memref<1x16xf32, #tpu.memory_space<vmem>>, %arg6: memref<1x2x6x16xbf16, #tpu.memory_space<vmem>>) attributes {dimension_semantics = [#tpu.dimension_semantics<parallel>, #tpu.dimension_semantics<parallel>], iteration_bounds = array<i64: 2, 4>, scalar_prefetch = 0 : i64, scratch_operands = 0 : i64, tpu.core_type = #tpu.core_type<tc>, window_params = [{transform_indices = @transform_0, window_bounds = array<i64: 1, 4, 15, 8>}, {transform_indices = @transform_1, window_bounds = array<i64: 1, 2, 15, 8>}, {pipeline_mode = #tpu.pipeline_mode<synchronous>, transform_indices = @transform_2, window_bounds = array<i64: 3, 24, 16>}, {pipeline_mode = #tpu.pipeline_mode<synchronous>, transform_indices = @transform_3, window_bounds = array<i64: 1, 16>}, {transform_indices = @transform_4, window_bounds = array<i64: 1, 2, 6, 16>}]} {
    %c0 = arith.constant 0 : index
    %c0_0 = arith.constant 0 : index
    %c0_1 = arith.constant 0 : index
    %c0_2 = arith.constant 0 : index
    %0 = vector.load %arg2[%c0, %c0_0, %c0_1, %c0_2] : memref<1x4x15x8xbf16, #tpu.memory_space<vmem>>, vector<1x4x15x8xbf16>
    %1 = vector.shape_cast %0 : vector<1x4x15x8xbf16> to vector<4x15x8xbf16>
    %c0_3 = arith.constant 0 : index
    %c0_4 = arith.constant 0 : index
    %c0_5 = arith.constant 0 : index
    %c0_6 = arith.constant 0 : index
    %2 = vector.load %arg3[%c0_3, %c0_4, %c0_5, %c0_6] : memref<1x2x15x8xbf16, #tpu.memory_space<vmem>>, vector<1x2x15x8xbf16>
    %3 = vector.shape_cast %2 : vector<1x2x15x8xbf16> to vector<2x15x8xbf16>
    %4 = vector.extract_strided_slice %1 {offsets = [0, 0, 0], sizes = [4, 13, 8], strides = [1, 1, 1]} : vector<4x15x8xbf16> to vector<4x13x8xbf16>
    %5 = vector.extract_strided_slice %1 {offsets = [0, 1, 0], sizes = [4, 13, 8], strides = [1, 1, 1]} : vector<4x15x8xbf16> to vector<4x13x8xbf16>
    %6 = vector.extract_strided_slice %1 {offsets = [0, 2, 0], sizes = [4, 13, 8], strides = [1, 1, 1]} : vector<4x15x8xbf16> to vector<4x13x8xbf16>
    %7 = tpu.concatenate %4, %5, %6 in 2 : vector<4x13x8xbf16>, vector<4x13x8xbf16>, vector<4x13x8xbf16> -> vector<4x13x24xbf16>
    %8 = vector.extract_strided_slice %3 {offsets = [0, 0, 0], sizes = [2, 13, 8], strides = [1, 1, 1]} : vector<2x15x8xbf16> to vector<2x13x8xbf16>
    %9 = vector.extract_strided_slice %3 {offsets = [0, 1, 0], sizes = [2, 13, 8], strides = [1, 1, 1]} : vector<2x15x8xbf16> to vector<2x13x8xbf16>
    %10 = vector.extract_strided_slice %3 {offsets = [0, 2, 0], sizes = [2, 13, 8], strides = [1, 1, 1]} : vector<2x15x8xbf16> to vector<2x13x8xbf16>
    %11 = tpu.concatenate %8, %9, %10 in 2 : vector<2x13x8xbf16>, vector<2x13x8xbf16>, vector<2x13x8xbf16> -> vector<2x13x24xbf16>
    %12 = tpu.concatenate %7, %11 in 0 : vector<4x13x24xbf16>, vector<2x13x24xbf16> -> vector<6x13x24xbf16>
    %13 = vector.extract_strided_slice %12 {offsets = [0, 0, 0], sizes = [4, 13, 24], strides = [1, 1, 1]} : vector<6x13x24xbf16> to vector<4x13x24xbf16>
    %14 = vector.shape_cast %13 : vector<4x13x24xbf16> to vector<52x24xbf16>
    %c0_7 = arith.constant 0 : index
    %c0_8 = arith.constant 0 : index
    %c0_9 = arith.constant 0 : index
    %15 = vector.load %arg4[%c0_7, %c0_8, %c0_9] : memref<3x24x16xbf16, #tpu.memory_space<vmem>>, vector<1x24x16xbf16>
    %16 = vector.shape_cast %15 : vector<1x24x16xbf16> to vector<24x16xbf16>
    %cst = arith.constant dense<0.000000e+00> : vector<52x16xf32>
    %17 = tpu.matmul %14, %16, %cst {dimension_numbers = #tpu.dot_dimension_numbers<[1], [0], [0], [1], [0, 0, 1, 1], [], []>} : vector<52x24xbf16>, vector<24x16xbf16>, vector<52x16xf32> -> vector<52x16xf32>
    %18 = vector.extract_strided_slice %12 {offsets = [1, 0, 0], sizes = [4, 13, 24], strides = [1, 1, 1]} : vector<6x13x24xbf16> to vector<4x13x24xbf16>
    %19 = vector.shape_cast %18 : vector<4x13x24xbf16> to vector<52x24xbf16>
    %c1 = arith.constant 1 : index
    %c0_10 = arith.constant 0 : index
    %c0_11 = arith.constant 0 : index
    %20 = vector.load %arg4[%c1, %c0_10, %c0_11] : memref<3x24x16xbf16, #tpu.memory_space<vmem>>, vector<1x24x16xbf16>
    %21 = vector.shape_cast %20 : vector<1x24x16xbf16> to vector<24x16xbf16>
    %cst_12 = arith.constant dense<0.000000e+00> : vector<52x16xf32>
    %22 = tpu.matmul %19, %21, %cst_12 {dimension_numbers = #tpu.dot_dimension_numbers<[1], [0], [0], [1], [0, 0, 1, 1], [], []>} : vector<52x24xbf16>, vector<24x16xbf16>, vector<52x16xf32> -> vector<52x16xf32>
    %23 = arith.addf %17, %22 : vector<52x16xf32>
    %24 = vector.extract_strided_slice %12 {offsets = [2, 0, 0], sizes = [4, 13, 24], strides = [1, 1, 1]} : vector<6x13x24xbf16> to vector<4x13x24xbf16>
    %25 = vector.shape_cast %24 : vector<4x13x24xbf16> to vector<52x24xbf16>
    %c2 = arith.constant 2 : index
    %c0_13 = arith.constant 0 : index
    %c0_14 = arith.constant 0 : index
    %26 = vector.load %arg4[%c2, %c0_13, %c0_14] : memref<3x24x16xbf16, #tpu.memory_space<vmem>>, vector<1x24x16xbf16>
    %27 = vector.shape_cast %26 : vector<1x24x16xbf16> to vector<24x16xbf16>
    %cst_15 = arith.constant dense<0.000000e+00> : vector<52x16xf32>
    %28 = tpu.matmul %25, %27, %cst_15 {dimension_numbers = #tpu.dot_dimension_numbers<[1], [0], [0], [1], [0, 0, 1, 1], [], []>} : vector<52x24xbf16>, vector<24x16xbf16>, vector<52x16xf32> -> vector<52x16xf32>
    %29 = arith.addf %23, %28 : vector<52x16xf32>
    %c0_16 = arith.constant 0 : index
    %c0_17 = arith.constant 0 : index
    %30 = vector.load %arg5[%c0_16, %c0_17] : memref<1x16xf32, #tpu.memory_space<vmem>>, vector<1x16xf32>
    %31 = vector.broadcast %30 : vector<1x16xf32> to vector<52x16xf32>
    %32 = arith.addf %29, %31 : vector<52x16xf32>
    %cst_18 = arith.constant 0.000000e+00 : f32
    %33 = vector.broadcast %cst_18 : f32 to vector<52x16xf32>
    %34 = arith.maximumf %32, %33 : vector<52x16xf32>
    %35 = vector.shape_cast %34 : vector<52x16xf32> to vector<4x13x16xf32>
    %36 = vector.extract_strided_slice %35 {offsets = [0, 0, 0], sizes = [4, 12, 16], strides = [1, 1, 1]} : vector<4x13x16xf32> to vector<4x12x16xf32>
    %37 = vector.shape_cast %36 : vector<4x12x16xf32> to vector<2x2x6x2x16xf32>
    %cst_19 = arith.constant dense<0xFF800000> : vector<2x6x16xf32>
    %38 = vector.multi_reduction <maximumf>, %37, %cst_19 [1, 3] : vector<2x2x6x2x16xf32> to vector<2x6x16xf32>
    %39 = arith.truncf %38 : vector<2x6x16xf32> to vector<2x6x16xbf16>
    %c0_20 = arith.constant 0 : index
    %c0_21 = arith.constant 0 : index
    %c0_22 = arith.constant 0 : index
    %c0_23 = arith.constant 0 : index
    %40 = vector.load %arg6[%c0_20, %c0_21, %c0_22, %c0_23] : memref<1x2x6x16xbf16, #tpu.memory_space<vmem>>, vector<1x2x6x16xbf16>
    %41 = vector.shape_cast %40 : vector<1x2x6x16xbf16> to vector<2x6x16xbf16>
    %42 = vector.shape_cast %39 : vector<2x6x16xbf16> to vector<1x2x6x16xbf16>
    tpu.vector_store %arg6[%c0_20, %c0_21, %c0_22, %c0_23], %42 {strides = array<i32>} : memref<1x2x6x16xbf16, #tpu.memory_space<vmem>>, vector<1x2x6x16xbf16>,
    return
  }
  func.func @transform_0(%arg0: i32, %arg1: i32) -> (i32, i32, i32, i32) {
    %c0_i32 = arith.constant 0 : i32
    %c0_i32_0 = arith.constant 0 : i32
    %c0_i32_1 = arith.constant 0 : i32
    return %arg0, %arg1, %c0_i32, %c0_i32_0 : i32, i32, i32, i32
  }
  func.func @transform_1(%arg0: i32, %arg1: i32) -> (i32, i32, i32, i32) {
    %c1_i32 = arith.constant 1 : i32
    %0 = arith.addi %arg1, %c1_i32 : i32
    %c2_i32 = arith.constant 2 : i32
    %1 = arith.muli %0, %c2_i32 : i32
    %c0_i32 = arith.constant 0 : i32
    %c0_i32_0 = arith.constant 0 : i32
    %c0_i32_1 = arith.constant 0 : i32
    return %arg0, %1, %c0_i32, %c0_i32_0 : i32, i32, i32, i32
  }
  func.func @transform_2(%arg0: i32, %arg1: i32) -> (i32, i32, i32) {
    %c0_i32 = arith.constant 0 : i32
    %c0_i32_0 = arith.constant 0 : i32
    %c0_i32_1 = arith.constant 0 : i32
    %c0_i32_2 = arith.constant 0 : i32
    return %c0_i32, %c0_i32_0, %c0_i32_1 : i32, i32, i32
  }
  func.func @transform_3(%arg0: i32, %arg1: i32) -> (i32, i32) {
    %c0_i32 = arith.constant 0 : i32
    %c0_i32_0 = arith.constant 0 : i32
    %c0_i32_1 = arith.constant 0 : i32
    return %c0_i32, %c0_i32_0 : i32, i32
  }
  func.func @transform_4(%arg0: i32, %arg1: i32) -> (i32, i32, i32, i32) {
    %c0_i32 = arith.constant 0 : i32
    %c0_i32_0 = arith.constant 0 : i32
    %c0_i32_1 = arith.constant 0 : i32
    return %arg0, %arg1, %c0_i32, %c0_i32_0 : i32, i32, i32, i32
  }
}

</mosaic_0001>

<llo_original>
// kernel: tpu_custom_call.1
$region0: #{tpu_custom_call.1}
  #allocation0 [shape = 'u32[]', space=smem, size = 0x4, offset = 0x4, fixed_abs, tag = 'smem constant byte address 0x4 - core index']
  #allocation1 [shape = 'u32[144,128]{1,0:T(1,128)}', space=vmem, size = 0x12000, scoped, tag = 'internal scratch']
  %s0 = inlined_call_operand.vmem [shape: bf16[2,18,15,8], index: 0, kind: input, shape index: {}]
  %s1 = inlined_call_operand.vmem [shape: bf16[2,18,15,8], index: 1, kind: input, shape index: {}]
  %s2 = inlined_call_operand.vmem [shape: bf16[3,24,16], index: 2, kind: input, shape index: {}]
  %s3 = inlined_call_operand.vmem [shape: f32[1,16], index: 3, kind: input, shape index: {}]
  %s4 = inlined_call_operand.vmem [shape: bf16[2,8,6,16], index: 4, kind: output, shape index: {}]
  %s5 = sld [smem:[#allocation0]]
  $region49: #{tpu_custom_call.1} parent=0
    _
  %s7 = ssub.s32 1, %s5
  %s8 = scalar_select 0, %s7, %s5
  loop: start=0, step=1, limit=10
  $region2: #{tpu_custom_call.1} parent=0 // loop_pre_header
    _
  $region3: #{tpu_custom_call.1} parent=0 // loop_header
    %s10 = sphi 0, %s14
    %p11 = scmp.ge.s32.totalorder %s10, 10
    %s17 = sphi 0, %s29
    %s18 = sphi 0, %s25
    %s19 = sphi 0, %s17
    %s20 = sphi 0, %s18
    %s21 = sphi 0, %s19
    %s22 = sphi 0, %s20
    %s34 = sphi 0, %s36
    %s37 = sphi 0, %s34
    %s38 = sphi 0, %s37
    %s54 = sphi 0, %s38
    %s66 = sphi 0, %s68
    %s69 = sphi 0, %s66
    %s70 = sphi 0, %s69
    %s86 = sphi 0, %s70
    %s90 = sphi 0, %s90
    %s92 = sphi 0, %s90
    %s93 = sphi 0, %s92
    %s107 = sphi 0, %s93
    %s111 = sphi 0, %s111
    %s113 = sphi 0, %s111
    %s114 = sphi 0, %s113
    %s128 = sphi 0, %s114
    %s136 = sphi 0, %s138
    %s139 = sphi 0, %s136
    %s140 = sphi 0, %s139
    %s156 = sphi 0, %s140
  $region4: #{tpu_custom_call.1} parent=0 // loop_header_branch
    %13 = sbr.rel (%p11) target = $region8
  $region5: #{tpu_custom_call.1} parent=0 // loop_body
    %s15 = ssub.s32 %s10, 1
    %s16 = ssub.s32 %s10, 2
    %s23 = sadd.s32 1, %s18
    %p24 = scmp.ge.s32.totalorder %s23, 4
    %s25 = scalar_select %p24, 0, %s23
    %s26 = sadd.s32 1, %s17
    %s27 = scalar_select %p24, %s26, %s17
    %p28 = scmp.ge.s32.totalorder %s27, 2
    %s29 = scalar_select %p28, 0, %s27
    %s30 = ssub.s32 %s17, %s29
    %s31 = ssub.s32 %s18, %s25
    %s32 = sor.u32 %s30, %s31
    %p33 = scmp.eq.s32.totalorder %s32, 0
    %s35 = sadd.s32 %s34, 1
    %s36 = scalar_select %p33, %s34, %s35
    %p39 = pneg %p33
    %p40 = scmp.eq.s32.totalorder %s10, 7
    %p41 = por %p39, %p40
    %p42 = scmp.ne.s32.totalorder %s34, %s37
    %p43 = scmp.eq.s32.totalorder %s10, 0
    %p44 = por %p42, %p43
    %p45 = scmp.ne.s32.totalorder %s34, %s37
    %p46 = scmp.eq.s32.totalorder %s15, 7
    %p47 = por %p45, %p46
    %p48 = scmp.ne.s32.totalorder %s37, %s38
    %p49 = scmp.eq.s32.totalorder %s15, 0
    %p50 = por %p48, %p49
    %p51 = scmp.ne.s32.totalorder %s37, %s38
    %p52 = scmp.eq.s32.totalorder %s16, 7
    %p53 = por %p51, %p52
    %p55 = scmp.ne.s32.totalorder %s38, %s54
    %p56 = scmp.eq.s32.totalorder %s16, 0
    %p57 = por %p55, %p56
    %s58 = sadd.s32 %s18, 1
    %s59 = smul.u32 %s58, 2
    %s60 = sadd.s32 %s25, 1
    %s61 = smul.u32 %s60, 2
    %s62 = ssub.s32 %s17, %s29
    %s63 = ssub.s32 %s59, %s61
    %s64 = sor.u32 %s62, %s63
    %p65 = scmp.eq.s32.totalorder %s64, 0
    %s67 = sadd.s32 %s66, 1
    %s68 = scalar_select %p65, %s66, %s67
    %p71 = pneg %p65
    %p72 = scmp.eq.s32.totalorder %s10, 7
    %p73 = por %p71, %p72
    %p74 = scmp.ne.s32.totalorder %s66, %s69
    %p75 = scmp.eq.s32.totalorder %s10, 0
    %p76 = por %p74, %p75
    %p77 = scmp.ne.s32.totalorder %s66, %s69
    %p78 = scmp.eq.s32.totalorder %s15, 7
    %p79 = por %p77, %p78
    %p80 = scmp.ne.s32.totalorder %s69, %s70
    %p81 = scmp.eq.s32.totalorder %s15, 0
    %p82 = por %p80, %p81
    %p83 = scmp.ne.s32.totalorder %s69, %s70
    %p84 = scmp.eq.s32.totalorder %s16, 7
    %p85 = por %p83, %p84
    %p87 = scmp.ne.s32.totalorder %s70, %s86
    %p88 = scmp.eq.s32.totalorder %s16, 0
    %p89 = por %p87, %p88
    %s91 = sadd.s32 %s90, 1
    %p94 = scmp.eq.s32.totalorder %s10, 7
    %p95 = scmp.ne.s32.totalorder %s90, %s92
    %p96 = scmp.eq.s32.totalorder %s10, 0
    %p97 = por %p95, %p96
    %p98 = scmp.ne.s32.totalorder %s90, %s92
    %p99 = scmp.eq.s32.totalorder %s15, 7
    %p100 = por %p98, %p99
    %p101 = scmp.ne.s32.totalorder %s92, %s93
    %p102 = scmp.eq.s32.totalorder %s15, 0
    %p103 = por %p101, %p102
    %p104 = scmp.ne.s32.totalorder %s92, %s93
    %p105 = scmp.eq.s32.totalorder %s16, 7
    %p106 = por %p104, %p105
    %p108 = scmp.ne.s32.totalorder %s93, %s107
    %p109 = scmp.eq.s32.totalorder %s16, 0
    %p110 = por %p108, %p109
    %s112 = sadd.s32 %s111, 1
    %p115 = scmp.eq.s32.totalorder %s10, 7
    %p116 = scmp.ne.s32.totalorder %s111, %s113
    %p117 = scmp.eq.s32.totalorder %s10, 0
    %p118 = por %p116, %p117
    %p119 = scmp.ne.s32.totalorder %s111, %s113
    %p120 = scmp.eq.s32.totalorder %s15, 7
    %p121 = por %p119, %p120
    %p122 = scmp.ne.s32.totalorder %s113, %s114
    %p123 = scmp.eq.s32.totalorder %s15, 0
    %p124 = por %p122, %p123
    %p125 = scmp.ne.s32.totalorder %s113, %s114
    %p126 = scmp.eq.s32.totalorder %s16, 7
    %p127 = por %p125, %p126
    %p129 = scmp.ne.s32.totalorder %s114, %s128
    %p130 = scmp.eq.s32.totalorder %s16, 0
    %p131 = por %p129, %p130
    %s132 = ssub.s32 %s17, %s29
    %s133 = ssub.s32 %s18, %s25
    %s134 = sor.u32 %s132, %s133
    %p135 = scmp.eq.s32.totalorder %s134, 0
    %s137 = sadd.s32 %s136, 1
    %s138 = scalar_select %p135, %s136, %s137
    %p141 = pneg %p135
    %p142 = scmp.eq.s32.totalorder %s10, 7
    %p143 = por %p141, %p142
    %p144 = scmp.ne.s32.totalorder %s136, %s139
    %p145 = scmp.eq.s32.totalorder %s10, 0
    %p146 = por %p144, %p145
    %p147 = scmp.ne.s32.totalorder %s136, %s139
    %p148 = scmp.eq.s32.totalorder %s15, 7
    %p149 = por %p147, %p148
    %p150 = scmp.ne.s32.totalorder %s139, %s140
    %p151 = scmp.eq.s32.totalorder %s15, 0
    %p152 = por %p150, %p151
    %p153 = scmp.ne.s32.totalorder %s139, %s140
    %p154 = scmp.eq.s32.totalorder %s16, 7
    %p155 = por %p153, %p154
    %p157 = scmp.ne.s32.totalorder %s140, %s156
    %p158 = scmp.eq.s32.totalorder %s16, 0
    %p159 = por %p157, %p158
    %p160 = scmp.le.s32.totalorder 1, %s10
    %p161 = scmp.lt.s32.totalorder %s10, 9
    %p162 = pnand %p160, %p161
    %p163 = pneg %p162
    // Predicated region
    $region9: #{tpu_custom_call.1} parent=5 // pred_check
      _
    $region10: #{tpu_custom_call.1} parent=5 // pred_check_branch
      %165 = sbr.rel (%p162) target = $region12
    $region11: #{tpu_custom_call.1} parent=5 // pred_region
      %s166 = ssub.s32 %s10, 1
      // Predicated region
      $region13: #{tpu_custom_call.1} parent=11 // pred_check
        %p167 = pneg %p103
      $region14: #{tpu_custom_call.1} parent=11 // pred_check_branch
        %169 = sbr.rel (%p167) target = $region16
      $region15: #{tpu_custom_call.1} parent=11 // pred_region
        _
      $region16: #{tpu_custom_call.1} parent=11 // pred_fallthru
        _
      // Predicated region
      $region17: #{tpu_custom_call.1} parent=11 // pred_check
        %p170 = pneg %p124
      $region18: #{tpu_custom_call.1} parent=11 // pred_check_branch
        %172 = sbr.rel (%p170) target = $region20
      $region19: #{tpu_custom_call.1} parent=11 // pred_region
        _
      $region20: #{tpu_custom_call.1} parent=11 // pred_fallthru
        _
    $region12: #{tpu_custom_call.1} parent=5 // pred_fallthru
      _
    %p173 = scmp.lt.s32.totalorder %s10, 8
    // Predicated region
    $region21: #{tpu_custom_call.1} parent=5 // pred_check
      %p174 = pneg %p173
    $region22: #{tpu_custom_call.1} parent=5 // pred_check_branch
      %176 = sbr.rel (%p174) target = $region24
    $region23: #{tpu_custom_call.1} parent=5 // pred_region
      // Predicated region
      $region25: #{tpu_custom_call.1} parent=23 // pred_check
        %p177 = pneg %p44
      $region26: #{tpu_custom_call.1} parent=23 // pred_check_branch
        %179 = sbr.rel (%p177) target = $region28
      $region27: #{tpu_custom_call.1} parent=23 // pred_region
        %s180 = smul.u32 4, %s18
        %s181 = ssub.s32 18, %s180
        %p182 = scmp.lt.s32.totalorder %s181, 4
        %s183 = scalar_select %p182, %s181, 4
        %s184 = smul.u32 64, %s183
        %s185 = smul.u32 %s184, 2
        %p186 = scmp.lt.s32.totalorder %s17, 1
        %s187 = scalar_select %p186, %s17, 1
        %p188 = scmp.lt.s32.totalorder %s180, 17
        %s189 = scalar_select %p188, %s180, 17
        %s190 = smul.addr %s189, 2
        %s191 = smul.addr %s187, 36
        %s192 = sadd.s32 %s190, %s191
        %s193 = smul.addr %s192, 4
        %s194 = scalar_lea.vmem %s0, %s193
        %s195 = smul.u32 4, %s18
        %s196 = ssub.s32 18, %s195
        %p197 = scmp.lt.s32.totalorder %s196, 4
        %s198 = scalar_select %p197, %s196, 4
        %s199 = smul.u32 64, %s198
        %s200 = smul.u32 %s199, 2
      $region28: #{tpu_custom_call.1} parent=23 // pred_fallthru
        _
      // Predicated region
      $region29: #{tpu_custom_call.1} parent=23 // pred_check
        %p201 = pneg %p76
      $region30: #{tpu_custom_call.1} parent=23 // pred_check_branch
        %203 = sbr.rel (%p201) target = $region32
      $region31: #{tpu_custom_call.1} parent=23 // pred_region
        %s204 = sadd.s32 %s18, 1
        %s205 = smul.u32 %s204, 2
        %s206 = smul.u32 2, %s205
        %p207 = scmp.lt.s32.totalorder %s17, 1
        %s208 = scalar_select %p207, %s17, 1
        %p209 = scmp.lt.s32.totalorder %s206, 17
        %s210 = scalar_select %p209, %s206, 17
        %s211 = smul.addr %s210, 2
        %s212 = smul.addr %s208, 36
        %s213 = sadd.s32 %s211, %s212
        %s214 = smul.addr %s213, 4
        %s215 = scalar_lea.vmem %s1, %s214
        %s216 = sadd.s32 %s18, 1
        %s217 = smul.u32 %s216, 2
        %s218 = smul.u32 2, %s217
      $region32: #{tpu_custom_call.1} parent=23 // pred_fallthru
        _
    $region24: #{tpu_custom_call.1} parent=5 // pred_fallthru
      _
    %p219 = scmp.le.s32.totalorder 1, %s10
    %p220 = scmp.lt.s32.totalorder %s10, 9
    %p221 = pnand %p219, %p220
    %p222 = pneg %p221
    // Predicated region
    $region33: #{tpu_custom_call.1} parent=5 // pred_check
      _
    $region34: #{tpu_custom_call.1} parent=5 // pred_check_branch
      %224 = sbr.rel (%p221) target = $region36
    $region35: #{tpu_custom_call.1} parent=5 // pred_region
      %s225 = ssub.s32 %s10, 1
      %s226 = smul.u32 4, %s20
      %s227 = ssub.s32 18, %s226
      %p228 = scmp.lt.s32.totalorder %s227, 4
      %s229 = scalar_select %p228, %s227, 4
      %s230 = smul.u32 64, %s229
      %s231 = smul.u32 %s230, 2
      %p232 = scmp.lt.s32.totalorder %s19, 1
      %s233 = scalar_select %p232, %s19, 1
      %p234 = scmp.lt.s32.totalorder %s226, 17
      %s235 = scalar_select %p234, %s226, 17
      %s236 = smul.addr %s235, 2
      %s237 = smul.addr %s233, 36
      %s238 = sadd.s32 %s236, %s237
      %s239 = smul.addr %s238, 4
      %s240 = scalar_lea.vmem %s0, %s239
      %p241 = pneg %p50
      %p242 = pneg %p47
      %s243 = sadd.s32 %s20, 1
      %s244 = smul.u32 %s243, 2
      %s245 = smul.u32 2, %s244
      %p246 = scmp.lt.s32.totalorder %s19, 1
      %s247 = scalar_select %p246, %s19, 1
      %p248 = scmp.lt.s32.totalorder %s245, 17
      %s249 = scalar_select %p248, %s245, 17
      %s250 = smul.addr %s249, 2
      %s251 = smul.addr %s247, 36
      %s252 = sadd.s32 %s250, %s251
      %s253 = smul.addr %s252, 4
      %s254 = scalar_lea.vmem %s1, %s253
      %p255 = pneg %p82
      %p256 = pneg %p79
      %p257 = pneg %p103
      %p258 = pneg %p100
      %p259 = pneg %p124
      %p260 = pneg %p121
      %p261 = pneg %p152
      %p262 = pneg %p149
      %s263 = smul.u32 2, %s20
      %p264 = scmp.lt.s32.totalorder %s19, 1
      %s265 = scalar_select %p264, %s19, 1
      %p266 = scmp.lt.s32.totalorder %s263, 7
      %s267 = scalar_select %p266, %s263, 7
      %s268 = smul.addr %s265, 8
      %s269 = sadd.s32 %s267, %s268
      %s270 = smul.addr %s269, 4
      %s271 = scalar_lea.vmem %s4, %s270
      %s272 = smul.u32 4, %s20
      %s273 = ssub.s32 18, %s272
      %p274 = scmp.lt.s32.totalorder %s273, 4
      %s275 = scalar_select %p274, %s273, 4
      %s276 = smul.u32 64, %s275
      %s277 = smul.u32 %s276, 2
      %p278 = scmp.lt.s32.totalorder %s19, 1
      %s279 = scalar_select %p278, %s19, 1
      %p280 = scmp.lt.s32.totalorder %s272, 17
      %s281 = scalar_select %p280, %s272, 17
      %s282 = smul.addr %s281, 2
      %s283 = smul.addr %s279, 36
      %s284 = sadd.s32 %s282, %s283
      %s285 = smul.addr %s284, 4
      %s286 = scalar_lea.vmem %s0, %s285
      %s287 = smul.u32 4, %s20
      %s288 = ssub.s32 18, %s287
      %p289 = scmp.lt.s32.totalorder %s288, 4
      %s290 = scalar_select %p289, %s288, 4
      %s291 = smul.u32 64, %s290
      %s292 = smul.u32 %s291, 2
      %s293 = sadd.s32 %s20, 1
      %s294 = smul.u32 %s293, 2
      %s295 = smul.u32 2, %s294
      %p296 = scmp.lt.s32.totalorder %s19, 1
      %s297 = scalar_select %p296, %s19, 1
      %p298 = scmp.lt.s32.totalorder %s295, 17
      %s299 = scalar_select %p298, %s295, 17
      %s300 = smul.addr %s299, 2
      %s301 = smul.addr %s297, 36
      %s302 = sadd.s32 %s300, %s301
      %s303 = smul.addr %s302, 4
      %s304 = scalar_lea.vmem %s1, %s303
      %s305 = sadd.s32 %s20, 1
      %s306 = smul.u32 %s305, 2
      %s307 = smul.u32 2, %s306
      %s308 = smul.u32 2, %s20
      %p309 = scmp.lt.s32.totalorder %s19, 1
      %s310 = scalar_select %p309, %s19, 1
      %p311 = scmp.lt.s32.totalorder %s308, 7
      %s312 = scalar_select %p311, %s308, 7
      %s313 = smul.addr %s310, 8
      %s314 = sadd.s32 %s312, %s313
      %s315 = smul.addr %s314, 4
      %s316 = scalar_lea.vmem %s4, %s315
      %s317 = smul.u32 2, %s20
      %v319 = vld [vmem:[%s286] sm:$0xf]
      %v320 = vld [vmem:[%s286 + $0x4] sm:$0xf]
      %v321 = vld [vmem:[%s286 + $0x8] sm:$0xf]
      %v322 = vld [vmem:[%s286 + $0xc] sm:$0xf]
      %v323 = vld [vmem:[%s286 + $0x10] sm:$0xf]
      %v324 = vld [vmem:[%s286 + $0x14] sm:$0xf]
      %v325 = vld [vmem:[%s286 + $0x18] sm:$0xf]
      %v326 = vld [vmem:[%s286 + $0x1c] sm:$0xf]
      %v327 = vld [vmem:[%s304] sm:$0xf]
      %v328 = vld [vmem:[%s304 + $0x4] sm:$0xf]
      %v329 = vld [vmem:[%s304 + $0x8] sm:$0xf]
      %v330 = vld [vmem:[%s304 + $0xc] sm:$0xf]
      %v339 = vunpack.c.l.b16 %v319
      %v340 = vunpack.c.l.b16 %v320
      %v341 = vunpack.c.l.b16 %v321
      %v342 = vunpack.c.l.b16 %v322
      %v343 = vunpack.c.l.b16 %v323
      %v344 = vunpack.c.l.b16 %v324
      %v345 = vunpack.c.l.b16 %v325
      %v346 = vunpack.c.l.b16 %v326
      %v347 = vpack.c.b16 %v340, %v339
      %v348 = vpack.c.b16 %v342, %v341
      %v349 = vpack.c.b16 %v344, %v343
      %v350 = vpack.c.b16 %v346, %v345
      %v352 = vshrl.u32 %v347, 16
      %v354 = vshll.u32 %v347, 16
      %v356 = vrot.slane %v354, 1
      %v357 = vor.u32 %v352, %v356
      %v359 = vshrl.u32 %v348, 16
      %v361 = vshll.u32 %v348, 16
      %v363 = vrot.slane %v361, 1
      %v364 = vor.u32 %v359, %v363
      %v366 = vshrl.u32 %v349, 16
      %v368 = vshll.u32 %v349, 16
      %v370 = vrot.slane %v368, 1
      %v371 = vor.u32 %v366, %v370
      %v373 = vshrl.u32 %v350, 16
      %v375 = vshll.u32 %v350, 16
      %v377 = vrot.slane %v375, 1
      %v378 = vor.u32 %v373, %v377
      %379 = vrot.lane.b32.xlu0 %v357, 8
      %v380 = vpop.permute.xlu0 %379
      %381 = vrot.lane.b32.xlu0 %v364, 8
      %v382 = vpop.permute.xlu0 %381
      %383 = vrot.lane.b32.xlu0 %v371, 8
      %v384 = vpop.permute.xlu0 %383
      %385 = vrot.lane.b32.xlu0 %v378, 8
      %v386 = vpop.permute.xlu0 %385
      %v387 = vrot.slane %v347, 1
      %v388 = vrot.slane %v348, 1
      %v389 = vrot.slane %v349, 1
      %v390 = vrot.slane %v350, 1
      %391 = vrot.lane.b32.xlu0 %v387, 16
      %v392 = vpop.permute.xlu0 %391
      %393 = vrot.lane.b32.xlu0 %v388, 16
      %v394 = vpop.permute.xlu0 %393
      %395 = vrot.lane.b32.xlu0 %v389, 16
      %v396 = vpop.permute.xlu0 %395
      %397 = vrot.lane.b32.xlu0 %v390, 16
      %v398 = vpop.permute.xlu0 %397
      %vm399 = vcmask 64512
      %v401 = vsel %vm399, %v347, %v380
      %v403 = vsel %vm399, %v348, %v382
      %v405 = vsel %vm399, %v349, %v384
      %v407 = vsel %vm399, %v350, %v386
      %vm408 = vcmask 130048
      %v410 = vsel %vm408, %v401, %v392
      %v412 = vsel %vm408, %v403, %v394
      %v414 = vsel %vm408, %v405, %v396
      %v416 = vsel %vm408, %v407, %v398
      %v421 = vunpack.c.l.b16 %v327
      %v422 = vunpack.c.l.b16 %v328
      %v423 = vunpack.c.l.b16 %v329
      %v424 = vunpack.c.l.b16 %v330
      %v425 = vpack.c.b16 %v422, %v421
      %v426 = vpack.c.b16 %v424, %v423
      %v428 = vshrl.u32 %v425, 16
      %v430 = vshll.u32 %v425, 16
      %v432 = vrot.slane %v430, 1
      %v433 = vor.u32 %v428, %v432
      %v435 = vshrl.u32 %v426, 16
      %v437 = vshll.u32 %v426, 16
      %v439 = vrot.slane %v437, 1
      %v440 = vor.u32 %v435, %v439
      %441 = vrot.lane.b32.xlu0 %v433, 8
      %v442 = vpop.permute.xlu0 %441
      %443 = vrot.lane.b32.xlu0 %v440, 8
      %v444 = vpop.permute.xlu0 %443
      %v445 = vrot.slane %v425, 1
      %v446 = vrot.slane %v426, 1
      %447 = vrot.lane.b32.xlu0 %v445, 16
      %v448 = vpop.permute.xlu0 %447
      %449 = vrot.lane.b32.xlu0 %v446, 16
      %v450 = vpop.permute.xlu0 %449
      %v452 = vsel %vm399, %v425, %v442
      %v454 = vsel %vm399, %v426, %v444
      %v456 = vsel %vm408, %v452, %v448
      %v458 = vsel %vm408, %v454, %v450
      %v463 = vcombine.high %v410, %v410
      %v465 = vunpack.c.l.s4 1966171168
      %v466 = vunpack.c.0.s8 %v465
      %v467 = vlaneseq
      %v468 = vshrl.u32 %v467, 7
      %v469 = vsub.s32 %v466, %v468
      %v470 = vrot.slane %v410, %v469
      %v472 = vunpack.c.l.s4 1966171168
      %v473 = vunpack.c.0.s8 %v472
      %v474 = vlaneseq
      %v475 = vshrl.u32 %v474, 7
      %v476 = vsub.s32 %v473, %v475
      %v477 = vrot.slane %v463, %v476
      %v478 = vcombine.high %v470, %v470
      %v479 = vcombine.high %v477, %v477
      %v481 = vunpack.c.l.s4 1966171168
      %v482 = vunpack.c.0.s8 %v481
      %v483 = vlaneseq
      %v484 = vshrl.u32 %v483, 7
      %v485 = vsub.s32 %v482, %v484
      %v486 = vrot.slane %v470, %v485
      %v488 = vunpack.c.l.s4 1966171168
      %v489 = vunpack.c.0.s8 %v488
      %v490 = vlaneseq
      %v491 = vshrl.u32 %v490, 7
      %v492 = vsub.s32 %v489, %v491
      %v493 = vrot.slane %v477, %v492
      %v495 = vunpack.c.l.s4 1966171168
      %v496 = vunpack.c.0.s8 %v495
      %v497 = vlaneseq
      %v498 = vshrl.u32 %v497, 7
      %v499 = vsub.s32 %v496, %v498
      %v500 = vrot.slane %v478, %v499
      %v502 = vunpack.c.l.s4 1966171168
      %v503 = vunpack.c.0.s8 %v502
      %v504 = vlaneseq
      %v505 = vshrl.u32 %v504, 7
      %v506 = vsub.s32 %v503, %v505
      %v507 = vrot.slane %v479, %v506
      %v508 = vcombine.high %v486, %v486
      %v509 = vcombine.high %v493, %v493
      %v510 = vcombine.high %v500, %v500
      %v511 = vcombine.high %v412, %v412
      %v513 = vunpack.c.l.s4 1966171168
      %v514 = vunpack.c.0.s8 %v513
      %v515 = vlaneseq
      %v516 = vshrl.u32 %v515, 7
      %v517 = vsub.s32 %v514, %v516
      %v518 = vrot.slane %v412, %v517
      %v520 = vunpack.c.l.s4 1966171168
      %v521 = vunpack.c.0.s8 %v520
      %v522 = vlaneseq
      %v523 = vshrl.u32 %v522, 7
      %v524 = vsub.s32 %v521, %v523
      %v525 = vrot.slane %v511, %v524
      %v526 = vcombine.high %v518, %v518
      %v527 = vcombine.high %v525, %v525
      %v529 = vunpack.c.l.s4 1966171168
      %v530 = vunpack.c.0.s8 %v529
      %v531 = vlaneseq
      %v532 = vshrl.u32 %v531, 7
      %v533 = vsub.s32 %v530, %v532
      %v534 = vrot.slane %v518, %v533
      %v536 = vunpack.c.l.s4 1966171168
      %v537 = vunpack.c.0.s8 %v536
      %v538 = vlaneseq
      %v539 = vshrl.u32 %v538, 7
      %v540 = vsub.s32 %v537, %v539
      %v541 = vrot.slane %v525, %v540
      %v543 = vunpack.c.l.s4 1966171168
      %v544 = vunpack.c.0.s8 %v543
      %v545 = vlaneseq
      %v546 = vshrl.u32 %v545, 7
      %v547 = vsub.s32 %v544, %v546
      %v548 = vrot.slane %v526, %v547
      %v550 = vunpack.c.l.s4 1966171168
      %v551 = vunpack.c.0.s8 %v550
      %v552 = vlaneseq
      %v553 = vshrl.u32 %v552, 7
      %v554 = vsub.s32 %v551, %v553
      %v555 = vrot.slane %v527, %v554
      %v556 = vcombine.high %v534, %v534
      %v557 = vcombine.high %v541, %v541
      %v558 = vcombine.high %v548, %v548
      %v559 = vcombine.high %v414, %v414
      %v561 = vunpack.c.l.s4 1966171168
      %v562 = vunpack.c.0.s8 %v561
      %v563 = vlaneseq
      %v564 = vshrl.u32 %v563, 7
      %v565 = vsub.s32 %v562, %v564
      %v566 = vrot.slane %v414, %v565
      %v568 = vunpack.c.l.s4 1966171168
      %v569 = vunpack.c.0.s8 %v568
      %v570 = vlaneseq
      %v571 = vshrl.u32 %v570, 7
      %v572 = vsub.s32 %v569, %v571
      %v573 = vrot.slane %v559, %v572
      %v574 = vcombine.high %v566, %v566
      %v575 = vcombine.high %v573, %v573
      %v577 = vunpack.c.l.s4 1966171168
      %v578 = vunpack.c.0.s8 %v577
      %v579 = vlaneseq
      %v580 = vshrl.u32 %v579, 7
      %v581 = vsub.s32 %v578, %v580
      %v582 = vrot.slane %v566, %v581
      %v584 = vunpack.c.l.s4 1966171168
      %v585 = vunpack.c.0.s8 %v584
      %v586 = vlaneseq
      %v587 = vshrl.u32 %v586, 7
      %v588 = vsub.s32 %v585, %v587
      %v589 = vrot.slane %v573, %v588
      %v591 = vunpack.c.l.s4 1966171168
      %v592 = vunpack.c.0.s8 %v591
      %v593 = vlaneseq
      %v594 = vshrl.u32 %v593, 7
      %v595 = vsub.s32 %v592, %v594
      %v596 = vrot.slane %v574, %v595
      %v598 = vunpack.c.l.s4 1966171168
      %v599 = vunpack.c.0.s8 %v598
      %v600 = vlaneseq
      %v601 = vshrl.u32 %v600, 7
      %v602 = vsub.s32 %v599, %v601
      %v603 = vrot.slane %v575, %v602
      %v604 = vcombine.high %v582, %v582
      %v605 = vcombine.high %v589, %v589
      %v606 = vcombine.high %v596, %v596
      %v607 = vcombine.high %v416, %v416
      %v609 = vunpack.c.l.s4 1966171168
      %v610 = vunpack.c.0.s8 %v609
      %v611 = vlaneseq
      %v612 = vshrl.u32 %v611, 7
      %v613 = vsub.s32 %v610, %v612
      %v614 = vrot.slane %v416, %v613
      %v616 = vunpack.c.l.s4 1966171168
      %v617 = vunpack.c.0.s8 %v616
      %v618 = vlaneseq
      %v619 = vshrl.u32 %v618, 7
      %v620 = vsub.s32 %v617, %v619
      %v621 = vrot.slane %v607, %v620
      %v622 = vcombine.high %v614, %v614
      %v623 = vcombine.high %v621, %v621
      %v625 = vunpack.c.l.s4 1966171168
      %v626 = vunpack.c.0.s8 %v625
      %v627 = vlaneseq
      %v628 = vshrl.u32 %v627, 7
      %v629 = vsub.s32 %v626, %v628
      %v630 = vrot.slane %v614, %v629
      %v632 = vunpack.c.l.s4 1966171168
      %v633 = vunpack.c.0.s8 %v632
      %v634 = vlaneseq
      %v635 = vshrl.u32 %v634, 7
      %v636 = vsub.s32 %v633, %v635
      %v637 = vrot.slane %v621, %v636
      %v639 = vunpack.c.l.s4 1966171168
      %v640 = vunpack.c.0.s8 %v639
      %v641 = vlaneseq
      %v642 = vshrl.u32 %v641, 7
      %v643 = vsub.s32 %v640, %v642
      %v644 = vrot.slane %v622, %v643
      %v646 = vunpack.c.l.s4 1966171168
      %v647 = vunpack.c.0.s8 %v646
      %v648 = vlaneseq
      %v649 = vshrl.u32 %v648, 7
      %v650 = vsub.s32 %v647, %v649
      %v651 = vrot.slane %v623, %v650
      %v652 = vcombine.high %v630, %v630
      %v653 = vcombine.high %v637, %v637
      %v654 = vcombine.high %v644, %v644
      %v655 = vunpack.i.l.s16 %v486
      %v656 = vunpack.i.h.s16 %v486
      %v657 = vunpack.i.l.s16 %v500
      %v658 = vunpack.i.h.s16 %v500
      %v659 = vunpack.i.l.s16 %v508
      %v660 = vunpack.i.h.s16 %v508
      %v661 = vunpack.i.l.s16 %v510
      %v662 = vunpack.i.h.s16 %v510
      %v663 = vunpack.i.l.s16 %v493
      %v664 = vunpack.i.h.s16 %v493
      %v665 = vunpack.i.l.s16 %v507
      %v666 = vunpack.i.h.s16 %v507
      %v667 = vunpack.i.l.s16 %v509
      %v668 = vunpack.i.l.s16 %v534
      %v669 = vunpack.i.h.s16 %v534
      %v670 = vunpack.i.l.s16 %v548
      %v671 = vunpack.i.h.s16 %v548
      %v672 = vunpack.i.l.s16 %v556
      %v673 = vunpack.i.h.s16 %v556
      %v674 = vunpack.i.l.s16 %v558
      %v675 = vunpack.i.h.s16 %v558
      %v676 = vunpack.i.l.s16 %v541
      %v677 = vunpack.i.h.s16 %v541
      %v678 = vunpack.i.l.s16 %v555
      %v679 = vunpack.i.h.s16 %v555
      %v680 = vunpack.i.l.s16 %v557
      %v681 = vunpack.i.l.s16 %v582
      %v682 = vunpack.i.h.s16 %v582
      %v683 = vunpack.i.l.s16 %v596
      %v684 = vunpack.i.h.s16 %v596
      %v685 = vunpack.i.l.s16 %v604
      %v686 = vunpack.i.h.s16 %v604
      %v687 = vunpack.i.l.s16 %v606
      %v688 = vunpack.i.h.s16 %v606
      %v689 = vunpack.i.l.s16 %v589
      %v690 = vunpack.i.h.s16 %v589
      %v691 = vunpack.i.l.s16 %v603
      %v692 = vunpack.i.h.s16 %v603
      %v693 = vunpack.i.l.s16 %v605
      %v694 = vunpack.i.l.s16 %v630
      %v695 = vunpack.i.h.s16 %v630
      %v696 = vunpack.i.l.s16 %v644
      %v697 = vunpack.i.h.s16 %v644
      %v698 = vunpack.i.l.s16 %v652
      %v699 = vunpack.i.h.s16 %v652
      %v700 = vunpack.i.l.s16 %v654
      %v701 = vunpack.i.h.s16 %v654
      %v702 = vunpack.i.l.s16 %v637
      %v703 = vunpack.i.h.s16 %v637
      %v704 = vunpack.i.l.s16 %v651
      %v705 = vunpack.i.h.s16 %v651
      %v706 = vunpack.i.l.s16 %v653
      %v707 = vld [vmem:[%s2] sm:$0xf]
      %v708 = vld [vmem:[%s2 + $0x4] sm:$0xf]
      %v709 = vld [vmem:[%s2 + $0x8] sm:$0xf]
      %v711 = vcombine.high %v456, %v456
      %v713 = vunpack.c.l.s4 1966171168
      %v714 = vunpack.c.0.s8 %v713
      %v715 = vlaneseq
      %v716 = vshrl.u32 %v715, 7
      %v717 = vsub.s32 %v714, %v716
      %v718 = vrot.slane %v456, %v717
      %v720 = vunpack.c.l.s4 1966171168
      %v721 = vunpack.c.0.s8 %v720
      %v722 = vlaneseq
      %v723 = vshrl.u32 %v722, 7
      %v724 = vsub.s32 %v721, %v723
      %v725 = vrot.slane %v711, %v724
      %v726 = vcombine.high %v718, %v718
      %v727 = vcombine.high %v725, %v725
      %v729 = vunpack.c.l.s4 1966171168
      %v730 = vunpack.c.0.s8 %v729
      %v731 = vlaneseq
      %v732 = vshrl.u32 %v731, 7
      %v733 = vsub.s32 %v730, %v732
      %v734 = vrot.slane %v718, %v733
      %v736 = vunpack.c.l.s4 1966171168
      %v737 = vunpack.c.0.s8 %v736
      %v738 = vlaneseq
      %v739 = vshrl.u32 %v738, 7
      %v740 = vsub.s32 %v737, %v739
      %v741 = vrot.slane %v725, %v740
      %v743 = vunpack.c.l.s4 1966171168
      %v744 = vunpack.c.0.s8 %v743
      %v745 = vlaneseq
      %v746 = vshrl.u32 %v745, 7
      %v747 = vsub.s32 %v744, %v746
      %v748 = vrot.slane %v726, %v747
      %v750 = vunpack.c.l.s4 1966171168
      %v751 = vunpack.c.0.s8 %v750
      %v752 = vlaneseq
      %v753 = vshrl.u32 %v752, 7
      %v754 = vsub.s32 %v751, %v753
      %v755 = vrot.slane %v727, %v754
      %v756 = vcombine.high %v734, %v734
      %v757 = vcombine.high %v741, %v741
      %v758 = vcombine.high %v748, %v748
      %v759 = vunpack.i.l.s16 %v734
      %v760 = vunpack.i.h.s16 %v734
      %v761 = vunpack.i.l.s16 %v748
      %v762 = vunpack.i.h.s16 %v748
      %v763 = vunpack.i.l.s16 %v756
      %v764 = vunpack.i.h.s16 %v756
      %v765 = vunpack.i.l.s16 %v758
      %v766 = vunpack.i.h.s16 %v758
      %v767 = vunpack.i.l.s16 %v741
      %v768 = vunpack.i.h.s16 %v741
      %v769 = vunpack.i.l.s16 %v755
      %v770 = vunpack.i.h.s16 %v755
      %v771 = vunpack.i.l.s16 %v757
      %s772 = scalar_lea.vmem %s2, 12
      %v773 = vld [vmem:[%s772] sm:$0xf]
      %v774 = vld [vmem:[%s772 + $0x4] sm:$0xf]
      %v775 = vld [vmem:[%s772 + $0x8] sm:$0xf]
      %v776 = vpack.i.b16 %v669, %v668
      %v777 = vpack.i.b16 %v671, %v670
      %v778 = vpack.i.b16 %v673, %v672
      %v779 = vpack.i.b16 %v675, %v674
      %v780 = vpack.i.b16 %v677, %v676
      %v781 = vpack.i.b16 %v679, %v678
      %v782 = vpack.i.b16 %v681, %v680
      %v783 = vpack.i.b16 %v683, %v682
      %v784 = vpack.i.b16 %v685, %v684
      %v785 = vpack.i.b16 %v687, %v686
      %v786 = vpack.i.b16 %v689, %v688
      %v787 = vpack.i.b16 %v691, %v690
      %v788 = vpack.i.b16 %v693, %v692
      %v789 = vpack.i.b16 %v695, %v694
      %v790 = vpack.i.b16 %v697, %v696
      %v791 = vpack.i.b16 %v699, %v698
      %v792 = vpack.i.b16 %v701, %v700
      %v793 = vpack.i.b16 %v703, %v702
      %v794 = vpack.i.b16 %v705, %v704
      %v795 = vpack.i.b16 %v759, %v706
      %v796 = vpack.i.b16 %v761, %v760
      %v797 = vpack.i.b16 %v763, %v762
      %v798 = vpack.i.b16 %v765, %v764
      %v799 = vpack.i.b16 %v767, %v766
      %v800 = vpack.i.b16 %v769, %v768
      %v801 = vpack.i.b16 %v771, %v770
      %v802 = vcombine.low %v776, %v777
      %v803 = vcombine.low %v778, %v779
      %v804 = vcombine.low %v780, %v781
      %v805 = vcombine.low %v782, %v783
      %v807 = vunpack.c.l.s4 1966171168
      %v808 = vunpack.c.0.s8 %v807
      %v809 = vlaneseq
      %v810 = vshrl.u32 %v809, 7
      %v811 = vsub.s32 %v808, %v810
      %v812 = vrot.slane %v802, %v811
      %v814 = vunpack.c.l.s4 1966171168
      %v815 = vunpack.c.0.s8 %v814
      %v816 = vlaneseq
      %v817 = vshrl.u32 %v816, 7
      %v818 = vsub.s32 %v815, %v817
      %v819 = vrot.slane %v803, %v818
      %v821 = vunpack.c.l.s4 1966171168
      %v822 = vunpack.c.0.s8 %v821
      %v823 = vlaneseq
      %v824 = vshrl.u32 %v823, 7
      %v825 = vsub.s32 %v822, %v824
      %v826 = vrot.slane %v804, %v825
      %v828 = vunpack.c.l.s4 1966171168
      %v829 = vunpack.c.0.s8 %v828
      %v830 = vlaneseq
      %v831 = vshrl.u32 %v830, 7
      %v832 = vsub.s32 %v829, %v831
      %v833 = vrot.slane %v805, %v832
      %v834 = vcombine.low %v812, %v819
      %v835 = vcombine.low %v826, %v833
      %v837 = vunpack.c.l.s4 1966171168
      %v838 = vunpack.c.0.s8 %v837
      %v839 = vlaneseq
      %v840 = vshrl.u32 %v839, 7
      %v841 = vsub.s32 %v838, %v840
      %v842 = vrot.slane %v834, %v841
      %v844 = vunpack.c.l.s4 1966171168
      %v845 = vunpack.c.0.s8 %v844
      %v846 = vlaneseq
      %v847 = vshrl.u32 %v846, 7
      %v848 = vsub.s32 %v845, %v847
      %v849 = vrot.slane %v835, %v848
      %v850 = vcombine.low %v842, %v849
      %v851 = vcombine.low %v784, %v785
      %v852 = vcombine.low %v786, %v787
      %v853 = vcombine.low %v788, %v789
      %v854 = vcombine.low %v790, %v791
      %v856 = vunpack.c.l.s4 1966171168
      %v857 = vunpack.c.0.s8 %v856
      %v858 = vlaneseq
      %v859 = vshrl.u32 %v858, 7
      %v860 = vsub.s32 %v857, %v859
      %v861 = vrot.slane %v851, %v860
      %v863 = vunpack.c.l.s4 1966171168
      %v864 = vunpack.c.0.s8 %v863
      %v865 = vlaneseq
      %v866 = vshrl.u32 %v865, 7
      %v867 = vsub.s32 %v864, %v866
      %v868 = vrot.slane %v852, %v867
      %v870 = vunpack.c.l.s4 1966171168
      %v871 = vunpack.c.0.s8 %v870
      %v872 = vlaneseq
      %v873 = vshrl.u32 %v872, 7
      %v874 = vsub.s32 %v871, %v873
      %v875 = vrot.slane %v853, %v874
      %v877 = vunpack.c.l.s4 1966171168
      %v878 = vunpack.c.0.s8 %v877
      %v879 = vlaneseq
      %v880 = vshrl.u32 %v879, 7
      %v881 = vsub.s32 %v878, %v880
      %v882 = vrot.slane %v854, %v881
      %v883 = vcombine.low %v861, %v868
      %v884 = vcombine.low %v875, %v882
      %v886 = vunpack.c.l.s4 1966171168
      %v887 = vunpack.c.0.s8 %v886
      %v888 = vlaneseq
      %v889 = vshrl.u32 %v888, 7
      %v890 = vsub.s32 %v887, %v889
      %v891 = vrot.slane %v883, %v890
      %v893 = vunpack.c.l.s4 1966171168
      %v894 = vunpack.c.0.s8 %v893
      %v895 = vlaneseq
      %v896 = vshrl.u32 %v895, 7
      %v897 = vsub.s32 %v894, %v896
      %v898 = vrot.slane %v884, %v897
      %v899 = vcombine.low %v891, %v898
      %v900 = vcombine.low %v792, %v793
      %v901 = vcombine.low %v794, %v795
      %v902 = vcombine.low %v796, %v797
      %v903 = vcombine.low %v798, %v799
      %v905 = vunpack.c.l.s4 1966171168
      %v906 = vunpack.c.0.s8 %v905
      %v907 = vlaneseq
      %v908 = vshrl.u32 %v907, 7
      %v909 = vsub.s32 %v906, %v908
      %v910 = vrot.slane %v900, %v909
      %v912 = vunpack.c.l.s4 1966171168
      %v913 = vunpack.c.0.s8 %v912
      %v914 = vlaneseq
      %v915 = vshrl.u32 %v914, 7
      %v916 = vsub.s32 %v913, %v915
      %v917 = vrot.slane %v901, %v916
      %v919 = vunpack.c.l.s4 1966171168
      %v920 = vunpack.c.0.s8 %v919
      %v921 = vlaneseq
      %v922 = vshrl.u32 %v921, 7
      %v923 = vsub.s32 %v920, %v922
      %v924 = vrot.slane %v902, %v923
      %v926 = vunpack.c.l.s4 1966171168
      %v927 = vunpack.c.0.s8 %v926
      %v928 = vlaneseq
      %v929 = vshrl.u32 %v928, 7
      %v930 = vsub.s32 %v927, %v929
      %v931 = vrot.slane %v903, %v930
      %v932 = vcombine.low %v910, %v917
      %v933 = vcombine.low %v924, %v931
      %v935 = vunpack.c.l.s4 1966171168
      %v936 = vunpack.c.0.s8 %v935
      %v937 = vlaneseq
      %v938 = vshrl.u32 %v937, 7
      %v939 = vsub.s32 %v936, %v938
      %v940 = vrot.slane %v932, %v939
      %v942 = vunpack.c.l.s4 1966171168
      %v943 = vunpack.c.0.s8 %v942
      %v944 = vlaneseq
      %v945 = vshrl.u32 %v944, 7
      %v946 = vsub.s32 %v943, %v945
      %v947 = vrot.slane %v933, %v946
      %v948 = vcombine.low %v940, %v947
      %v949 = vcombine.low %v800, %v801
      %v951 = vunpack.c.l.s4 1966171168
      %v952 = vunpack.c.0.s8 %v951
      %v953 = vlaneseq
      %v954 = vshrl.u32 %v953, 7
      %v955 = vsub.s32 %v952, %v954
      %v956 = vrot.slane %v949, %v955
      %v958 = vunpack.c.l.s4 1966171168
      %v959 = vunpack.c.0.s8 %v958
      %v960 = vlaneseq
      %v961 = vshrl.u32 %v960, 7
      %v962 = vsub.s32 %v959, %v961
      %v963 = vrot.slane %v956, %v962
      %v967 = vunpack.c.l.b16 %v773
      %v968 = vunpack.c.l.b16 %v774
      %v969 = vunpack.c.l.b16 %v775
      %v970 = vpack.c.b16 %v968, %v967
      %v971 = vpack.c.b16 %v969, %v969
      %vm973 = vcmask 195584
      %v975 = vsel %vm973, %v850, 0
      %v978 = vsel %vm973, %v899, 0
      %v981 = vsel %vm973, %v948, 0
      %v984 = vsel %vm973, %v963, 0
      %vm986 = vcmask 1043456
      %v988 = vsel %vm986, %v971, 0
      %990 = vmatprep.subr.bf16.mxu0 0
      %991 = vmatpush1.bf16.msra.mxu0 %v970
      %992 = vmatprep.subr.bf16.mxu0 0
      %993 = vmatpush1.bf16.msra.mxu0 %v988
      %994 = vmatprep.subr.bf16.mxu0 0
      %995 = vmatpush1.bf16.msra.mxu0 0
      %996 = vmatprep.subr.bf16.mxu0 0
      %997 = vmatpush1.bf16.msra.mxu0 0
      %998 = vmatprep.subr.bf16.mxu0 0
      %999 = vmatpush1.bf16.msra.mxu0 0
      %1000 = vmatprep.subr.bf16.mxu0 0
      %1001 = vmatpush1.bf16.msra.mxu0 0
      %1002 = vmatprep.subr.bf16.mxu0 0
      %1003 = vmatpush1.bf16.msra.mxu0 0
      %1004 = vmatprep.subr.bf16.mxu0 0
      %1005 = vmatpush1.bf16.msra.mxu0 0
      %1006 = vmatprep.subr.bf16.mxu0 0
      %1007 = vmatpush1.bf16.msra.mxu0 0
      %1008 = vmatprep.subr.bf16.mxu0 0
      %1009 = vmatpush1.bf16.msra.mxu0 0
      %1010 = vmatprep.subr.bf16.mxu0 0
      %1011 = vmatpush1.bf16.msra.mxu0 0
      %1012 = vmatprep.subr.bf16.mxu0 0
      %1013 = vmatpush1.bf16.msra.mxu0 0
      %1014 = vmatprep.subr.bf16.mxu0 0
      %1015 = vmatpush1.bf16.msra.mxu0 0
      %1016 = vmatprep.subr.bf16.mxu0 0
      %1017 = vmatpush1.bf16.msra.mxu0 0
      %1018 = vmatprep.subr.bf16.mxu0 0
      %1019 = vmatpush1.bf16.msra.mxu0 0
      %1020 = vmatprep.subr.bf16.mxu0 0
      %1021 = vmatpush1.bf16.msra.mxu0 0
      %1022 = vmatprep.mubr.bf16.mxu0 0
      %1023 = vmatmul.mubr.bf16.gmra.mrb[0].mxu0 %v975
      %v1024 = vpop.f32.mrb[0].mxu0
      %v1025 = vadd.f32 0.0, %v1024
      %v1026 = vpop.f32.mrb[0].mxu0
      %v1027 = vpop.f32.mrb[0].mxu0
      %v1028 = vadd.f32 0.0, %v1027
      %v1029 = vpop.f32.mrb[0].mxu0
      %1030 = vmatprep.mubr.bf16.mxu0 0
      %1031 = vmatmul.mubr.bf16.gmra.mrb[0].mxu0 %v978
      %v1032 = vpop.f32.mrb[0].mxu0
      %v1033 = vadd.f32 0.0, %v1032
      %v1034 = vpop.f32.mrb[0].mxu0
      %v1035 = vpop.f32.mrb[0].mxu0
      %v1036 = vadd.f32 0.0, %v1035
      %v1037 = vpop.f32.mrb[0].mxu0
      %1038 = vmatprep.mubr.bf16.mxu0 0
      %1039 = vmatmul.mubr.bf16.gmra.mrb[0].mxu0 %v981
      %v1040 = vpop.f32.mrb[0].mxu0
      %v1041 = vadd.f32 0.0, %v1040
      %v1042 = vpop.f32.mrb[0].mxu0
      %v1043 = vpop.f32.mrb[0].mxu0
      %v1044 = vadd.f32 0.0, %v1043
      %v1045 = vpop.f32.mrb[0].mxu0
      %1046 = vmatprep.mubr.bf16.mxu0 0
      %1047 = vmatmul.mubr.bf16.gmra.mrb[0].mxu0 %v984
      %v1048 = vpop.f32.mrb[0].mxu0
      %v1049 = vadd.f32 0.0, %v1048
      %v1050 = vpop.f32.mrb[0].mxu0
      %v1051 = vpop.f32.mrb[0].mxu0
      %v1052 = vpop.f32.mrb[0].mxu0
      %1053 = vdwg.mxu0
      %v1054 = vpack.i.b16 %v656, %v655
      %v1055 = vpack.i.b16 %v658, %v657
      %v1056 = vpack.i.b16 %v660, %v659
      %v1057 = vpack.i.b16 %v662, %v661
      %v1058 = vpack.i.b16 %v664, %v663
      %v1059 = vpack.i.b16 %v666, %v665
      %v1060 = vpack.i.b16 %v668, %v667
      %v1061 = vpack.i.b16 %v670, %v669
      %v1062 = vpack.i.b16 %v672, %v671
      %v1063 = vpack.i.b16 %v674, %v673
      %v1064 = vpack.i.b16 %v676, %v675
      %v1065 = vpack.i.b16 %v678, %v677
      %v1066 = vpack.i.b16 %v680, %v679
      %v1067 = vpack.i.b16 %v682, %v681
      %v1068 = vpack.i.b16 %v684, %v683
      %v1069 = vpack.i.b16 %v686, %v685
      %v1070 = vpack.i.b16 %v688, %v687
      %v1071 = vpack.i.b16 %v690, %v689
      %v1072 = vpack.i.b16 %v692, %v691
      %v1073 = vpack.i.b16 %v694, %v693
      %v1074 = vpack.i.b16 %v696, %v695
      %v1075 = vpack.i.b16 %v698, %v697
      %v1076 = vpack.i.b16 %v700, %v699
      %v1077 = vpack.i.b16 %v702, %v701
      %v1078 = vpack.i.b16 %v704, %v703
      %v1079 = vpack.i.b16 %v706, %v705
      %v1080 = vcombine.low %v1054, %v1055
      %v1081 = vcombine.low %v1056, %v1057
      %v1082 = vcombine.low %v1058, %v1059
      %v1083 = vcombine.low %v1060, %v1061
      %v1085 = vunpack.c.l.s4 1966171168
      %v1086 = vunpack.c.0.s8 %v1085
      %v1087 = vlaneseq
      %v1088 = vshrl.u32 %v1087, 7
      %v1089 = vsub.s32 %v1086, %v1088
      %v1090 = vrot.slane %v1080, %v1089
      %v1092 = vunpack.c.l.s4 1966171168
      %v1093 = vunpack.c.0.s8 %v1092
      %v1094 = vlaneseq
      %v1095 = vshrl.u32 %v1094, 7
      %v1096 = vsub.s32 %v1093, %v1095
      %v1097 = vrot.slane %v1081, %v1096
      %v1099 = vunpack.c.l.s4 1966171168
      %v1100 = vunpack.c.0.s8 %v1099
      %v1101 = vlaneseq
      %v1102 = vshrl.u32 %v1101, 7
      %v1103 = vsub.s32 %v1100, %v1102
      %v1104 = vrot.slane %v1082, %v1103
      %v1106 = vunpack.c.l.s4 1966171168
      %v1107 = vunpack.c.0.s8 %v1106
      %v1108 = vlaneseq
      %v1109 = vshrl.u32 %v1108, 7
      %v1110 = vsub.s32 %v1107, %v1109
      %v1111 = vrot.slane %v1083, %v1110
      %v1112 = vcombine.low %v1090, %v1097
      %v1113 = vcombine.low %v1104, %v1111
      %v1115 = vunpack.c.l.s4 1966171168
      %v1116 = vunpack.c.0.s8 %v1115
      %v1117 = vlaneseq
      %v1118 = vshrl.u32 %v1117, 7
      %v1119 = vsub.s32 %v1116, %v1118
      %v1120 = vrot.slane %v1112, %v1119
      %v1122 = vunpack.c.l.s4 1966171168
      %v1123 = vunpack.c.0.s8 %v1122
      %v1124 = vlaneseq
      %v1125 = vshrl.u32 %v1124, 7
      %v1126 = vsub.s32 %v1123, %v1125
      %v1127 = vrot.slane %v1113, %v1126
      %v1128 = vcombine.low %v1120, %v1127
      %v1129 = vcombine.low %v1062, %v1063
      %v1130 = vcombine.low %v1064, %v1065
      %v1131 = vcombine.low %v1066, %v1067
      %v1132 = vcombine.low %v1068, %v1069
      %v1134 = vunpack.c.l.s4 1966171168
      %v1135 = vunpack.c.0.s8 %v1134
      %v1136 = vlaneseq
      %v1137 = vshrl.u32 %v1136, 7
      %v1138 = vsub.s32 %v1135, %v1137
      %v1139 = vrot.slane %v1129, %v1138
      %v1141 = vunpack.c.l.s4 1966171168
      %v1142 = vunpack.c.0.s8 %v1141
      %v1143 = vlaneseq
      %v1144 = vshrl.u32 %v1143, 7
      %v1145 = vsub.s32 %v1142, %v1144
      %v1146 = vrot.slane %v1130, %v1145
      %v1148 = vunpack.c.l.s4 1966171168
      %v1149 = vunpack.c.0.s8 %v1148
      %v1150 = vlaneseq
      %v1151 = vshrl.u32 %v1150, 7
      %v1152 = vsub.s32 %v1149, %v1151
      %v1153 = vrot.slane %v1131, %v1152
      %v1155 = vunpack.c.l.s4 1966171168
      %v1156 = vunpack.c.0.s8 %v1155
      %v1157 = vlaneseq
      %v1158 = vshrl.u32 %v1157, 7
      %v1159 = vsub.s32 %v1156, %v1158
      %v1160 = vrot.slane %v1132, %v1159
      %v1161 = vcombine.low %v1139, %v1146
      %v1162 = vcombine.low %v1153, %v1160
      %v1164 = vunpack.c.l.s4 1966171168
      %v1165 = vunpack.c.0.s8 %v1164
      %v1166 = vlaneseq
      %v1167 = vshrl.u32 %v1166, 7
      %v1168 = vsub.s32 %v1165, %v1167
      %v1169 = vrot.slane %v1161, %v1168
      %v1171 = vunpack.c.l.s4 1966171168
      %v1172 = vunpack.c.0.s8 %v1171
      %v1173 = vlaneseq
      %v1174 = vshrl.u32 %v1173, 7
      %v1175 = vsub.s32 %v1172, %v1174
      %v1176 = vrot.slane %v1162, %v1175
      %v1177 = vcombine.low %v1169, %v1176
      %v1178 = vcombine.low %v1070, %v1071
      %v1179 = vcombine.low %v1072, %v1073
      %v1180 = vcombine.low %v1074, %v1075
      %v1181 = vcombine.low %v1076, %v1077
      %v1183 = vunpack.c.l.s4 1966171168
      %v1184 = vunpack.c.0.s8 %v1183
      %v1185 = vlaneseq
      %v1186 = vshrl.u32 %v1185, 7
      %v1187 = vsub.s32 %v1184, %v1186
      %v1188 = vrot.slane %v1178, %v1187
      %v1190 = vunpack.c.l.s4 1966171168
      %v1191 = vunpack.c.0.s8 %v1190
      %v1192 = vlaneseq
      %v1193 = vshrl.u32 %v1192, 7
      %v1194 = vsub.s32 %v1191, %v1193
      %v1195 = vrot.slane %v1179, %v1194
      %v1197 = vunpack.c.l.s4 1966171168
      %v1198 = vunpack.c.0.s8 %v1197
      %v1199 = vlaneseq
      %v1200 = vshrl.u32 %v1199, 7
      %v1201 = vsub.s32 %v1198, %v1200
      %v1202 = vrot.slane %v1180, %v1201
      %v1204 = vunpack.c.l.s4 1966171168
      %v1205 = vunpack.c.0.s8 %v1204
      %v1206 = vlaneseq
      %v1207 = vshrl.u32 %v1206, 7
      %v1208 = vsub.s32 %v1205, %v1207
      %v1209 = vrot.slane %v1181, %v1208
      %v1210 = vcombine.low %v1188, %v1195
      %v1211 = vcombine.low %v1202, %v1209
      %v1213 = vunpack.c.l.s4 1966171168
      %v1214 = vunpack.c.0.s8 %v1213
      %v1215 = vlaneseq
      %v1216 = vshrl.u32 %v1215, 7
      %v1217 = vsub.s32 %v1214, %v1216
      %v1218 = vrot.slane %v1210, %v1217
      %v1220 = vunpack.c.l.s4 1966171168
      %v1221 = vunpack.c.0.s8 %v1220
      %v1222 = vlaneseq
      %v1223 = vshrl.u32 %v1222, 7
      %v1224 = vsub.s32 %v1221, %v1223
      %v1225 = vrot.slane %v1211, %v1224
      %v1226 = vcombine.low %v1218, %v1225
      %v1227 = vcombine.low %v1078, %v1079
      %v1229 = vunpack.c.l.s4 1966171168
      %v1230 = vunpack.c.0.s8 %v1229
      %v1231 = vlaneseq
      %v1232 = vshrl.u32 %v1231, 7
      %v1233 = vsub.s32 %v1230, %v1232
      %v1234 = vrot.slane %v1227, %v1233
      %v1236 = vunpack.c.l.s4 1966171168
      %v1237 = vunpack.c.0.s8 %v1236
      %v1238 = vlaneseq
      %v1239 = vshrl.u32 %v1238, 7
      %v1240 = vsub.s32 %v1237, %v1239
      %v1241 = vrot.slane %v1234, %v1240
      %v1245 = vunpack.c.l.b16 %v707
      %v1246 = vunpack.c.l.b16 %v708
      %v1247 = vunpack.c.l.b16 %v709
      %v1248 = vpack.c.b16 %v1246, %v1245
      %v1249 = vpack.c.b16 %v1247, %v1247
      %v1252 = vsel %vm973, %v1128, 0
      %v1255 = vsel %vm973, %v1177, 0
      %v1258 = vsel %vm973, %v1226, 0
      %v1261 = vsel %vm973, %v1241, 0
      %v1264 = vsel %vm986, %v1249, 0
      %1266 = vmatprep.subr.bf16.mxu0 0
      %1267 = vmatpush1.bf16.msra.mxu0 %v1248
      %1268 = vmatprep.subr.bf16.mxu0 0
      %1269 = vmatpush1.bf16.msra.mxu0 %v1264
      %1270 = vmatprep.subr.bf16.mxu0 0
      %1271 = vmatpush1.bf16.msra.mxu0 0
      %1272 = vmatprep.subr.bf16.mxu0 0
      %1273 = vmatpush1.bf16.msra.mxu0 0
      %1274 = vmatprep.subr.bf16.mxu0 0
      %1275 = vmatpush1.bf16.msra.mxu0 0
      %1276 = vmatprep.subr.bf16.mxu0 0
      %1277 = vmatpush1.bf16.msra.mxu0 0
      %1278 = vmatprep.subr.bf16.mxu0 0
      %1279 = vmatpush1.bf16.msra.mxu0 0
      %1280 = vmatprep.subr.bf16.mxu0 0
      %1281 = vmatpush1.bf16.msra.mxu0 0
      %1282 = vmatprep.subr.bf16.mxu0 0
      %1283 = vmatpush1.bf16.msra.mxu0 0
      %1284 = vmatprep.subr.bf16.mxu0 0
      %1285 = vmatpush1.bf16.msra.mxu0 0
      %1286 = vmatprep.subr.bf16.mxu0 0
      %1287 = vmatpush1.bf16.msra.mxu0 0
      %1288 = vmatprep.subr.bf16.mxu0 0
      %1289 = vmatpush1.bf16.msra.mxu0 0
      %1290 = vmatprep.subr.bf16.mxu0 0
      %1291 = vmatpush1.bf16.msra.mxu0 0
      %1292 = vmatprep.subr.bf16.mxu0 0
      %1293 = vmatpush1.bf16.msra.mxu0 0
      %1294 = vmatprep.subr.bf16.mxu0 0
      %1295 = vmatpush1.bf16.msra.mxu0 0
      %1296 = vmatprep.subr.bf16.mxu0 0
      %1297 = vmatpush1.bf16.msra.mxu0 0
      %1298 = vmatprep.mubr.bf16.mxu0 0
      %1299 = vmatmul.mubr.bf16.gmra.mrb[0].mxu0 %v1252
      %v1300 = vpop.f32.mrb[0].mxu0
      %v1301 = vadd.f32 %v1025, %v1300
      %v1302 = vpop.f32.mrb[0].mxu0
      %v1303 = vpop.f32.mrb[0].mxu0
      %v1304 = vadd.f32 %v1028, %v1303
      %v1305 = vpop.f32.mrb[0].mxu0
      %1306 = vmatprep.mubr.bf16.mxu0 0
      %1307 = vmatmul.mubr.bf16.gmra.mrb[0].mxu0 %v1255
      %v1308 = vpop.f32.mrb[0].mxu0
      %v1309 = vadd.f32 %v1033, %v1308
      %v1310 = vpop.f32.mrb[0].mxu0
      %v1311 = vpop.f32.mrb[0].mxu0
      %v1312 = vadd.f32 %v1036, %v1311
      %v1313 = vpop.f32.mrb[0].mxu0
      %1314 = vmatprep.mubr.bf16.mxu0 0
      %1315 = vmatmul.mubr.bf16.gmra.mrb[0].mxu0 %v1258
      %v1316 = vpop.f32.mrb[0].mxu0
      %v1317 = vadd.f32 %v1041, %v1316
      %v1318 = vpop.f32.mrb[0].mxu0
      %v1319 = vpop.f32.mrb[0].mxu0
      %v1320 = vadd.f32 %v1044, %v1319
      %v1321 = vpop.f32.mrb[0].mxu0
      %1322 = vmatprep.mubr.bf16.mxu0 0
      %1323 = vmatmul.mubr.bf16.gmra.mrb[0].mxu0 %v1261
      %v1324 = vpop.f32.mrb[0].mxu0
      %v1325 = vadd.f32 %v1049, %v1324
      %v1326 = vpop.f32.mrb[0].mxu0
      %v1327 = vpop.f32.mrb[0].mxu0
      %v1328 = vpop.f32.mrb[0].mxu0
      %1329 = vdwg.mxu0
      %v1331 = vcombine.high %v458, %v458
      %v1333 = vunpack.c.l.s4 1966171168
      %v1334 = vunpack.c.0.s8 %v1333
      %v1335 = vlaneseq
      %v1336 = vshrl.u32 %v1335, 7
      %v1337 = vsub.s32 %v1334, %v1336
      %v1338 = vrot.slane %v458, %v1337
      %v1340 = vunpack.c.l.s4 1966171168
      %v1341 = vunpack.c.0.s8 %v1340
      %v1342 = vlaneseq
      %v1343 = vshrl.u32 %v1342, 7
      %v1344 = vsub.s32 %v1341, %v1343
      %v1345 = vrot.slane %v1331, %v1344
      %v1346 = vcombine.high %v1338, %v1338
      %v1347 = vcombine.high %v1345, %v1345
      %v1349 = vunpack.c.l.s4 1966171168
      %v1350 = vunpack.c.0.s8 %v1349
      %v1351 = vlaneseq
      %v1352 = vshrl.u32 %v1351, 7
      %v1353 = vsub.s32 %v1350, %v1352
      %v1354 = vrot.slane %v1338, %v1353
      %v1356 = vunpack.c.l.s4 1966171168
      %v1357 = vunpack.c.0.s8 %v1356
      %v1358 = vlaneseq
      %v1359 = vshrl.u32 %v1358, 7
      %v1360 = vsub.s32 %v1357, %v1359
      %v1361 = vrot.slane %v1345, %v1360
      %v1363 = vunpack.c.l.s4 1966171168
      %v1364 = vunpack.c.0.s8 %v1363
      %v1365 = vlaneseq
      %v1366 = vshrl.u32 %v1365, 7
      %v1367 = vsub.s32 %v1364, %v1366
      %v1368 = vrot.slane %v1346, %v1367
      %v1370 = vunpack.c.l.s4 1966171168
      %v1371 = vunpack.c.0.s8 %v1370
      %v1372 = vlaneseq
      %v1373 = vshrl.u32 %v1372, 7
      %v1374 = vsub.s32 %v1371, %v1373
      %v1375 = vrot.slane %v1347, %v1374
      %v1376 = vcombine.high %v1354, %v1354
      %v1377 = vcombine.high %v1361, %v1361
      %v1378 = vcombine.high %v1368, %v1368
      %v1379 = vunpack.i.l.s16 %v1354
      %v1380 = vunpack.i.h.s16 %v1354
      %v1381 = vunpack.i.l.s16 %v1368
      %v1382 = vunpack.i.h.s16 %v1368
      %v1383 = vunpack.i.l.s16 %v1376
      %v1384 = vunpack.i.h.s16 %v1376
      %v1385 = vunpack.i.l.s16 %v1378
      %v1386 = vunpack.i.h.s16 %v1378
      %v1387 = vunpack.i.l.s16 %v1361
      %v1388 = vunpack.i.h.s16 %v1361
      %v1389 = vunpack.i.l.s16 %v1375
      %v1390 = vunpack.i.h.s16 %v1375
      %v1391 = vunpack.i.l.s16 %v1377
      %s1392 = scalar_lea.vmem %s2, 24
      %v1393 = vld [vmem:[%s1392] sm:$0xf]
      %v1394 = vld [vmem:[%s1392 + $0x4] sm:$0xf]
      %v1395 = vld [vmem:[%s1392 + $0x8] sm:$0xf]
      %v1396 = vpack.i.b16 %v760, %v759
      %v1397 = vpack.i.b16 %v762, %v761
      %v1398 = vpack.i.b16 %v764, %v763
      %v1399 = vpack.i.b16 %v766, %v765
      %v1400 = vpack.i.b16 %v768, %v767
      %v1401 = vpack.i.b16 %v770, %v769
      %v1402 = vpack.i.b16 %v1379, %v771
      %v1403 = vpack.i.b16 %v1381, %v1380
      %v1404 = vpack.i.b16 %v1383, %v1382
      %v1405 = vpack.i.b16 %v1385, %v1384
      %v1406 = vpack.i.b16 %v1387, %v1386
      %v1407 = vpack.i.b16 %v1389, %v1388
      %v1408 = vpack.i.b16 %v1391, %v1390
      %v1409 = vcombine.low %v1067, %v1068
      %v1410 = vcombine.low %v1069, %v1070
      %v1411 = vcombine.low %v1071, %v1072
      %v1412 = vcombine.low %v1073, %v1074
      %v1414 = vunpack.c.l.s4 1966171168
      %v1415 = vunpack.c.0.s8 %v1414
      %v1416 = vlaneseq
      %v1417 = vshrl.u32 %v1416, 7
      %v1418 = vsub.s32 %v1415, %v1417
      %v1419 = vrot.slane %v1409, %v1418
      %v1421 = vunpack.c.l.s4 1966171168
      %v1422 = vunpack.c.0.s8 %v1421
      %v1423 = vlaneseq
      %v1424 = vshrl.u32 %v1423, 7
      %v1425 = vsub.s32 %v1422, %v1424
      %v1426 = vrot.slane %v1410, %v1425
      %v1428 = vunpack.c.l.s4 1966171168
      %v1429 = vunpack.c.0.s8 %v1428
      %v1430 = vlaneseq
      %v1431 = vshrl.u32 %v1430, 7
      %v1432 = vsub.s32 %v1429, %v1431
      %v1433 = vrot.slane %v1411, %v1432
      %v1435 = vunpack.c.l.s4 1966171168
      %v1436 = vunpack.c.0.s8 %v1435
      %v1437 = vlaneseq
      %v1438 = vshrl.u32 %v1437, 7
      %v1439 = vsub.s32 %v1436, %v1438
      %v1440 = vrot.slane %v1412, %v1439
      %v1441 = vcombine.low %v1419, %v1426
      %v1442 = vcombine.low %v1433, %v1440
      %v1444 = vunpack.c.l.s4 1966171168
      %v1445 = vunpack.c.0.s8 %v1444
      %v1446 = vlaneseq
      %v1447 = vshrl.u32 %v1446, 7
      %v1448 = vsub.s32 %v1445, %v1447
      %v1449 = vrot.slane %v1441, %v1448
      %v1451 = vunpack.c.l.s4 1966171168
      %v1452 = vunpack.c.0.s8 %v1451
      %v1453 = vlaneseq
      %v1454 = vshrl.u32 %v1453, 7
      %v1455 = vsub.s32 %v1452, %v1454
      %v1456 = vrot.slane %v1442, %v1455
      %v1457 = vcombine.low %v1449, %v1456
      %v1458 = vcombine.low %v1075, %v1076
      %v1459 = vcombine.low %v1077, %v1078
      %v1460 = vcombine.low %v1079, %v1396
      %v1461 = vcombine.low %v1397, %v1398
      %v1463 = vunpack.c.l.s4 1966171168
      %v1464 = vunpack.c.0.s8 %v1463
      %v1465 = vlaneseq
      %v1466 = vshrl.u32 %v1465, 7
      %v1467 = vsub.s32 %v1464, %v1466
      %v1468 = vrot.slane %v1458, %v1467
      %v1470 = vunpack.c.l.s4 1966171168
      %v1471 = vunpack.c.0.s8 %v1470
      %v1472 = vlaneseq
      %v1473 = vshrl.u32 %v1472, 7
      %v1474 = vsub.s32 %v1471, %v1473
      %v1475 = vrot.slane %v1459, %v1474
      %v1477 = vunpack.c.l.s4 1966171168
      %v1478 = vunpack.c.0.s8 %v1477
      %v1479 = vlaneseq
      %v1480 = vshrl.u32 %v1479, 7
      %v1481 = vsub.s32 %v1478, %v1480
      %v1482 = vrot.slane %v1460, %v1481
      %v1484 = vunpack.c.l.s4 1966171168
      %v1485 = vunpack.c.0.s8 %v1484
      %v1486 = vlaneseq
      %v1487 = vshrl.u32 %v1486, 7
      %v1488 = vsub.s32 %v1485, %v1487
      %v1489 = vrot.slane %v1461, %v1488
      %v1490 = vcombine.low %v1468, %v1475
      %v1491 = vcombine.low %v1482, %v1489
      %v1493 = vunpack.c.l.s4 1966171168
      %v1494 = vunpack.c.0.s8 %v1493
      %v1495 = vlaneseq
      %v1496 = vshrl.u32 %v1495, 7
      %v1497 = vsub.s32 %v1494, %v1496
      %v1498 = vrot.slane %v1490, %v1497
      %v1500 = vunpack.c.l.s4 1966171168
      %v1501 = vunpack.c.0.s8 %v1500
      %v1502 = vlaneseq
      %v1503 = vshrl.u32 %v1502, 7
      %v1504 = vsub.s32 %v1501, %v1503
      %v1505 = vrot.slane %v1491, %v1504
      %v1506 = vcombine.low %v1498, %v1505
      %v1507 = vcombine.low %v1399, %v1400
      %v1508 = vcombine.low %v1401, %v1402
      %v1509 = vcombine.low %v1403, %v1404
      %v1510 = vcombine.low %v1405, %v1406
      %v1512 = vunpack.c.l.s4 1966171168
      %v1513 = vunpack.c.0.s8 %v1512
      %v1514 = vlaneseq
      %v1515 = vshrl.u32 %v1514, 7
      %v1516 = vsub.s32 %v1513, %v1515
      %v1517 = vrot.slane %v1507, %v1516
      %v1519 = vunpack.c.l.s4 1966171168
      %v1520 = vunpack.c.0.s8 %v1519
      %v1521 = vlaneseq
      %v1522 = vshrl.u32 %v1521, 7
      %v1523 = vsub.s32 %v1520, %v1522
      %v1524 = vrot.slane %v1508, %v1523
      %v1526 = vunpack.c.l.s4 1966171168
      %v1527 = vunpack.c.0.s8 %v1526
      %v1528 = vlaneseq
      %v1529 = vshrl.u32 %v1528, 7
      %v1530 = vsub.s32 %v1527, %v1529
      %v1531 = vrot.slane %v1509, %v1530
      %v1533 = vunpack.c.l.s4 1966171168
      %v1534 = vunpack.c.0.s8 %v1533
      %v1535 = vlaneseq
      %v1536 = vshrl.u32 %v1535, 7
      %v1537 = vsub.s32 %v1534, %v1536
      %v1538 = vrot.slane %v1510, %v1537
      %v1539 = vcombine.low %v1517, %v1524
      %v1540 = vcombine.low %v1531, %v1538
      %v1542 = vunpack.c.l.s4 1966171168
      %v1543 = vunpack.c.0.s8 %v1542
      %v1544 = vlaneseq
      %v1545 = vshrl.u32 %v1544, 7
      %v1546 = vsub.s32 %v1543, %v1545
      %v1547 = vrot.slane %v1539, %v1546
      %v1549 = vunpack.c.l.s4 1966171168
      %v1550 = vunpack.c.0.s8 %v1549
      %v1551 = vlaneseq
      %v1552 = vshrl.u32 %v1551, 7
      %v1553 = vsub.s32 %v1550, %v1552
      %v1554 = vrot.slane %v1540, %v1553
      %v1555 = vcombine.low %v1547, %v1554
      %v1556 = vcombine.low %v1407, %v1408
      %v1558 = vunpack.c.l.s4 1966171168
      %v1559 = vunpack.c.0.s8 %v1558
      %v1560 = vlaneseq
      %v1561 = vshrl.u32 %v1560, 7
      %v1562 = vsub.s32 %v1559, %v1561
      %v1563 = vrot.slane %v1556, %v1562
      %v1565 = vunpack.c.l.s4 1966171168
      %v1566 = vunpack.c.0.s8 %v1565
      %v1567 = vlaneseq
      %v1568 = vshrl.u32 %v1567, 7
      %v1569 = vsub.s32 %v1566, %v1568
      %v1570 = vrot.slane %v1563, %v1569
      %v1574 = vunpack.c.l.b16 %v1393
      %v1575 = vunpack.c.l.b16 %v1394
      %v1576 = vunpack.c.l.b16 %v1395
      %v1577 = vpack.c.b16 %v1575, %v1574
      %v1578 = vpack.c.b16 %v1576, %v1576
      %v1581 = vsel %vm973, %v1457, 0
      %v1584 = vsel %vm973, %v1506, 0
      %v1587 = vsel %vm973, %v1555, 0
      %v1590 = vsel %vm973, %v1570, 0
      %v1593 = vsel %vm986, %v1578, 0
      %1595 = vmatprep.subr.bf16.mxu0 0
      %1596 = vmatpush1.bf16.msra.mxu0 %v1577
      %1597 = vmatprep.subr.bf16.mxu0 0
      %1598 = vmatpush1.bf16.msra.mxu0 %v1593
      %1599 = vmatprep.subr.bf16.mxu0 0
      %1600 = vmatpush1.bf16.msra.mxu0 0
      %1601 = vmatprep.subr.bf16.mxu0 0
      %1602 = vmatpush1.bf16.msra.mxu0 0
      %1603 = vmatprep.subr.bf16.mxu0 0
      %1604 = vmatpush1.bf16.msra.mxu0 0
      %1605 = vmatprep.subr.bf16.mxu0 0
      %1606 = vmatpush1.bf16.msra.mxu0 0
      %1607 = vmatprep.subr.bf16.mxu0 0
      %1608 = vmatpush1.bf16.msra.mxu0 0
      %1609 = vmatprep.subr.bf16.mxu0 0
      %1610 = vmatpush1.bf16.msra.mxu0 0
      %1611 = vmatprep.subr.bf16.mxu0 0
      %1612 = vmatpush1.bf16.msra.mxu0 0
      %1613 = vmatprep.subr.bf16.mxu0 0
      %1614 = vmatpush1.bf16.msra.mxu0 0
      %1615 = vmatprep.subr.bf16.mxu0 0
      %1616 = vmatpush1.bf16.msra.mxu0 0
      %1617 = vmatprep.subr.bf16.mxu0 0
      %1618 = vmatpush1.bf16.msra.mxu0 0
      %1619 = vmatprep.subr.bf16.mxu0 0
      %1620 = vmatpush1.bf16.msra.mxu0 0
      %1621 = vmatprep.subr.bf16.mxu0 0
      %1622 = vmatpush1.bf16.msra.mxu0 0
      %1623 = vmatprep.subr.bf16.mxu0 0
      %1624 = vmatpush1.bf16.msra.mxu0 0
      %1625 = vmatprep.subr.bf16.mxu0 0
      %1626 = vmatpush1.bf16.msra.mxu0 0
      %1627 = vmatprep.mubr.bf16.mxu0 0
      %1628 = vmatmul.mubr.bf16.gmra.mrb[0].mxu0 %v1581
      %v1629 = vpop.f32.mrb[0].mxu0
      %v1630 = vadd.f32 0.0, %v1629
      %v1631 = vpop.f32.mrb[0].mxu0
      %v1632 = vpop.f32.mrb[0].mxu0
      %v1633 = vadd.f32 0.0, %v1632
      %v1634 = vpop.f32.mrb[0].mxu0
      %1635 = vmatprep.mubr.bf16.mxu0 0
      %1636 = vmatmul.mubr.bf16.gmra.mrb[0].mxu0 %v1584
      %v1637 = vpop.f32.mrb[0].mxu0
      %v1638 = vadd.f32 0.0, %v1637
      %v1639 = vpop.f32.mrb[0].mxu0
      %v1640 = vpop.f32.mrb[0].mxu0
      %v1641 = vadd.f32 0.0, %v1640
      %v1642 = vpop.f32.mrb[0].mxu0
      %1643 = vmatprep.mubr.bf16.mxu0 0
      %1644 = vmatmul.mubr.bf16.gmra.mrb[0].mxu0 %v1587
      %v1645 = vpop.f32.mrb[0].mxu0
      %v1646 = vadd.f32 0.0, %v1645
      %v1647 = vpop.f32.mrb[0].mxu0
      %v1648 = vpop.f32.mrb[0].mxu0
      %v1649 = vadd.f32 0.0, %v1648
      %v1650 = vpop.f32.mrb[0].mxu0
      %1651 = vmatprep.mubr.bf16.mxu0 0
      %1652 = vmatmul.mubr.bf16.gmra.mrb[0].mxu0 %v1590
      %v1653 = vpop.f32.mrb[0].mxu0
      %v1654 = vadd.f32 0.0, %v1653
      %v1655 = vpop.f32.mrb[0].mxu0
      %v1656 = vpop.f32.mrb[0].mxu0
      %v1657 = vpop.f32.mrb[0].mxu0
      %1658 = vdwg.mxu0
      %v1659 = vadd.f32 %v1301, %v1630
      %v1660 = vadd.f32 %v1304, %v1633
      %v1661 = vadd.f32 %v1309, %v1638
      %v1662 = vadd.f32 %v1312, %v1641
      %v1663 = vadd.f32 %v1317, %v1646
      %v1664 = vadd.f32 %v1320, %v1649
      %v1665 = vadd.f32 %v1325, %v1654
      %v1666 = vld [vmem:[%s3] sm:$0x1]
      %v1668 = vlaneseq
      %v1669 = vshrl.u32 %v1668, 7
      %v1670 = vsub.s32 0, %v1669
      %v1671 = vrot.slane %v1666, %v1670
      %v1673 = vadd.f32 %v1659, %v1671
      %v1674 = vadd.f32 %v1660, %v1671
      %v1675 = vadd.f32 %v1661, %v1671
      %v1676 = vadd.f32 %v1662, %v1671
      %v1677 = vadd.f32 %v1663, %v1671
      %v1678 = vadd.f32 %v1664, %v1671
      %v1679 = vadd.f32 %v1665, %v1671
      %v1680 = vmax.f32 %v1673, 0.0
      %v1681 = vmax.f32 %v1674, 0.0
      %v1682 = vmax.f32 %v1675, 0.0
      %v1683 = vmax.f32 %v1676, 0.0
      %v1684 = vmax.f32 %v1677, 0.0
      %v1685 = vmax.f32 %v1678, 0.0
      %v1686 = vmax.f32 %v1679, 0.0
      %v1694 = vcombine.high %v1680, %v1680
      %v1696 = vunpack.c.l.s4 1966171168
      %v1697 = vunpack.c.0.s8 %v1696
      %v1698 = vlaneseq
      %v1699 = vshrl.u32 %v1698, 7
      %v1700 = vsub.s32 %v1697, %v1699
      %v1701 = vrot.slane %v1680, %v1700
      %v1703 = vunpack.c.l.s4 1966171168
      %v1704 = vunpack.c.0.s8 %v1703
      %v1705 = vlaneseq
      %v1706 = vshrl.u32 %v1705, 7
      %v1707 = vsub.s32 %v1704, %v1706
      %v1708 = vrot.slane %v1694, %v1707
      %v1709 = vcombine.high %v1701, %v1701
      %v1710 = vcombine.high %v1708, %v1708
      %v1712 = vunpack.c.l.s4 1966171168
      %v1713 = vunpack.c.0.s8 %v1712
      %v1714 = vlaneseq
      %v1715 = vshrl.u32 %v1714, 7
      %v1716 = vsub.s32 %v1713, %v1715
      %v1717 = vrot.slane %v1701, %v1716
      %v1719 = vunpack.c.l.s4 1966171168
      %v1720 = vunpack.c.0.s8 %v1719
      %v1721 = vlaneseq
      %v1722 = vshrl.u32 %v1721, 7
      %v1723 = vsub.s32 %v1720, %v1722
      %v1724 = vrot.slane %v1708, %v1723
      %v1726 = vunpack.c.l.s4 1966171168
      %v1727 = vunpack.c.0.s8 %v1726
      %v1728 = vlaneseq
      %v1729 = vshrl.u32 %v1728, 7
      %v1730 = vsub.s32 %v1727, %v1729
      %v1731 = vrot.slane %v1709, %v1730
      %v1733 = vunpack.c.l.s4 1966171168
      %v1734 = vunpack.c.0.s8 %v1733
      %v1735 = vlaneseq
      %v1736 = vshrl.u32 %v1735, 7
      %v1737 = vsub.s32 %v1734, %v1736
      %v1738 = vrot.slane %v1710, %v1737
      %v1739 = vcombine.high %v1717, %v1717
      %v1740 = vcombine.high %v1724, %v1724
      %v1741 = vcombine.high %v1731, %v1731
      %v1742 = vcombine.high %v1738, %v1738
      %v1743 = vcombine.high %v1681, %v1681
      %v1745 = vunpack.c.l.s4 1966171168
      %v1746 = vunpack.c.0.s8 %v1745
      %v1747 = vlaneseq
      %v1748 = vshrl.u32 %v1747, 7
      %v1749 = vsub.s32 %v1746, %v1748
      %v1750 = vrot.slane %v1681, %v1749
      %v1752 = vunpack.c.l.s4 1966171168
      %v1753 = vunpack.c.0.s8 %v1752
      %v1754 = vlaneseq
      %v1755 = vshrl.u32 %v1754, 7
      %v1756 = vsub.s32 %v1753, %v1755
      %v1757 = vrot.slane %v1743, %v1756
      %v1758 = vcombine.high %v1750, %v1750
      %v1759 = vcombine.high %v1757, %v1757
      %v1761 = vunpack.c.l.s4 1966171168
      %v1762 = vunpack.c.0.s8 %v1761
      %v1763 = vlaneseq
      %v1764 = vshrl.u32 %v1763, 7
      %v1765 = vsub.s32 %v1762, %v1764
      %v1766 = vrot.slane %v1750, %v1765
      %v1768 = vunpack.c.l.s4 1966171168
      %v1769 = vunpack.c.0.s8 %v1768
      %v1770 = vlaneseq
      %v1771 = vshrl.u32 %v1770, 7
      %v1772 = vsub.s32 %v1769, %v1771
      %v1773 = vrot.slane %v1757, %v1772
      %v1775 = vunpack.c.l.s4 1966171168
      %v1776 = vunpack.c.0.s8 %v1775
      %v1777 = vlaneseq
      %v1778 = vshrl.u32 %v1777, 7
      %v1779 = vsub.s32 %v1776, %v1778
      %v1780 = vrot.slane %v1758, %v1779
      %v1782 = vunpack.c.l.s4 1966171168
      %v1783 = vunpack.c.0.s8 %v1782
      %v1784 = vlaneseq
      %v1785 = vshrl.u32 %v1784, 7
      %v1786 = vsub.s32 %v1783, %v1785
      %v1787 = vrot.slane %v1759, %v1786
      %v1788 = vcombine.high %v1766, %v1766
      %v1789 = vcombine.high %v1773, %v1773
      %v1790 = vcombine.high %v1780, %v1780
      %v1791 = vcombine.high %v1787, %v1787
      %v1792 = vcombine.high %v1682, %v1682
      %v1794 = vunpack.c.l.s4 1966171168
      %v1795 = vunpack.c.0.s8 %v1794
      %v1796 = vlaneseq
      %v1797 = vshrl.u32 %v1796, 7
      %v1798 = vsub.s32 %v1795, %v1797
      %v1799 = vrot.slane %v1682, %v1798
      %v1801 = vunpack.c.l.s4 1966171168
      %v1802 = vunpack.c.0.s8 %v1801
      %v1803 = vlaneseq
      %v1804 = vshrl.u32 %v1803, 7
      %v1805 = vsub.s32 %v1802, %v1804
      %v1806 = vrot.slane %v1792, %v1805
      %v1807 = vcombine.high %v1799, %v1799
      %v1808 = vcombine.high %v1806, %v1806
      %v1810 = vunpack.c.l.s4 1966171168
      %v1811 = vunpack.c.0.s8 %v1810
      %v1812 = vlaneseq
      %v1813 = vshrl.u32 %v1812, 7
      %v1814 = vsub.s32 %v1811, %v1813
      %v1815 = vrot.slane %v1799, %v1814
      %v1817 = vunpack.c.l.s4 1966171168
      %v1818 = vunpack.c.0.s8 %v1817
      %v1819 = vlaneseq
      %v1820 = vshrl.u32 %v1819, 7
      %v1821 = vsub.s32 %v1818, %v1820
      %v1822 = vrot.slane %v1806, %v1821
      %v1824 = vunpack.c.l.s4 1966171168
      %v1825 = vunpack.c.0.s8 %v1824
      %v1826 = vlaneseq
      %v1827 = vshrl.u32 %v1826, 7
      %v1828 = vsub.s32 %v1825, %v1827
      %v1829 = vrot.slane %v1807, %v1828
      %v1831 = vunpack.c.l.s4 1966171168
      %v1832 = vunpack.c.0.s8 %v1831
      %v1833 = vlaneseq
      %v1834 = vshrl.u32 %v1833, 7
      %v1835 = vsub.s32 %v1832, %v1834
      %v1836 = vrot.slane %v1808, %v1835
      %v1837 = vcombine.high %v1815, %v1815
      %v1838 = vcombine.high %v1822, %v1822
      %v1839 = vcombine.high %v1829, %v1829
      %v1840 = vcombine.high %v1836, %v1836
      %v1841 = vcombine.high %v1683, %v1683
      %v1843 = vunpack.c.l.s4 1966171168
      %v1844 = vunpack.c.0.s8 %v1843
      %v1845 = vlaneseq
      %v1846 = vshrl.u32 %v1845, 7
      %v1847 = vsub.s32 %v1844, %v1846
      %v1848 = vrot.slane %v1683, %v1847
      %v1850 = vunpack.c.l.s4 1966171168
      %v1851 = vunpack.c.0.s8 %v1850
      %v1852 = vlaneseq
      %v1853 = vshrl.u32 %v1852, 7
      %v1854 = vsub.s32 %v1851, %v1853
      %v1855 = vrot.slane %v1841, %v1854
      %v1856 = vcombine.high %v1848, %v1848
      %v1857 = vcombine.high %v1855, %v1855
      %v1859 = vunpack.c.l.s4 1966171168
      %v1860 = vunpack.c.0.s8 %v1859
      %v1861 = vlaneseq
      %v1862 = vshrl.u32 %v1861, 7
      %v1863 = vsub.s32 %v1860, %v1862
      %v1864 = vrot.slane %v1848, %v1863
      %v1866 = vunpack.c.l.s4 1966171168
      %v1867 = vunpack.c.0.s8 %v1866
      %v1868 = vlaneseq
      %v1869 = vshrl.u32 %v1868, 7
      %v1870 = vsub.s32 %v1867, %v1869
      %v1871 = vrot.slane %v1855, %v1870
      %v1873 = vunpack.c.l.s4 1966171168
      %v1874 = vunpack.c.0.s8 %v1873
      %v1875 = vlaneseq
      %v1876 = vshrl.u32 %v1875, 7
      %v1877 = vsub.s32 %v1874, %v1876
      %v1878 = vrot.slane %v1856, %v1877
      %v1880 = vunpack.c.l.s4 1966171168
      %v1881 = vunpack.c.0.s8 %v1880
      %v1882 = vlaneseq
      %v1883 = vshrl.u32 %v1882, 7
      %v1884 = vsub.s32 %v1881, %v1883
      %v1885 = vrot.slane %v1857, %v1884
      %v1886 = vcombine.high %v1864, %v1864
      %v1887 = vcombine.high %v1871, %v1871
      %v1888 = vcombine.high %v1878, %v1878
      %v1889 = vcombine.high %v1885, %v1885
      %v1890 = vcombine.high %v1684, %v1684
      %v1892 = vunpack.c.l.s4 1966171168
      %v1893 = vunpack.c.0.s8 %v1892
      %v1894 = vlaneseq
      %v1895 = vshrl.u32 %v1894, 7
      %v1896 = vsub.s32 %v1893, %v1895
      %v1897 = vrot.slane %v1684, %v1896
      %v1899 = vunpack.c.l.s4 1966171168
      %v1900 = vunpack.c.0.s8 %v1899
      %v1901 = vlaneseq
      %v1902 = vshrl.u32 %v1901, 7
      %v1903 = vsub.s32 %v1900, %v1902
      %v1904 = vrot.slane %v1890, %v1903
      %v1905 = vcombine.high %v1897, %v1897
      %v1906 = vcombine.high %v1904, %v1904
      %v1908 = vunpack.c.l.s4 1966171168
      %v1909 = vunpack.c.0.s8 %v1908
      %v1910 = vlaneseq
      %v1911 = vshrl.u32 %v1910, 7
      %v1912 = vsub.s32 %v1909, %v1911
      %v1913 = vrot.slane %v1897, %v1912
      %v1915 = vunpack.c.l.s4 1966171168
      %v1916 = vunpack.c.0.s8 %v1915
      %v1917 = vlaneseq
      %v1918 = vshrl.u32 %v1917, 7
      %v1919 = vsub.s32 %v1916, %v1918
      %v1920 = vrot.slane %v1904, %v1919
      %v1922 = vunpack.c.l.s4 1966171168
      %v1923 = vunpack.c.0.s8 %v1922
      %v1924 = vlaneseq
      %v1925 = vshrl.u32 %v1924, 7
      %v1926 = vsub.s32 %v1923, %v1925
      %v1927 = vrot.slane %v1905, %v1926
      %v1929 = vunpack.c.l.s4 1966171168
      %v1930 = vunpack.c.0.s8 %v1929
      %v1931 = vlaneseq
      %v1932 = vshrl.u32 %v1931, 7
      %v1933 = vsub.s32 %v1930, %v1932
      %v1934 = vrot.slane %v1906, %v1933
      %v1935 = vcombine.high %v1913, %v1913
      %v1936 = vcombine.high %v1927, %v1927
      %v1937 = vcombine.high %v1934, %v1934
      %v1938 = vcombine.high %v1685, %v1685
      %v1940 = vunpack.c.l.s4 1966171168
      %v1941 = vunpack.c.0.s8 %v1940
      %v1942 = vlaneseq
      %v1943 = vshrl.u32 %v1942, 7
      %v1944 = vsub.s32 %v1941, %v1943
      %v1945 = vrot.slane %v1685, %v1944
      %v1947 = vunpack.c.l.s4 1966171168
      %v1948 = vunpack.c.0.s8 %v1947
      %v1949 = vlaneseq
      %v1950 = vshrl.u32 %v1949, 7
      %v1951 = vsub.s32 %v1948, %v1950
      %v1952 = vrot.slane %v1938, %v1951
      %v1953 = vcombine.high %v1945, %v1945
      %v1954 = vcombine.high %v1952, %v1952
      %v1956 = vunpack.c.l.s4 1966171168
      %v1957 = vunpack.c.0.s8 %v1956
      %v1958 = vlaneseq
      %v1959 = vshrl.u32 %v1958, 7
      %v1960 = vsub.s32 %v1957, %v1959
      %v1961 = vrot.slane %v1945, %v1960
      %v1963 = vunpack.c.l.s4 1966171168
      %v1964 = vunpack.c.0.s8 %v1963
      %v1965 = vlaneseq
      %v1966 = vshrl.u32 %v1965, 7
      %v1967 = vsub.s32 %v1964, %v1966
      %v1968 = vrot.slane %v1952, %v1967
      %v1970 = vunpack.c.l.s4 1966171168
      %v1971 = vunpack.c.0.s8 %v1970
      %v1972 = vlaneseq
      %v1973 = vshrl.u32 %v1972, 7
      %v1974 = vsub.s32 %v1971, %v1973
      %v1975 = vrot.slane %v1953, %v1974
      %v1977 = vunpack.c.l.s4 1966171168
      %v1978 = vunpack.c.0.s8 %v1977
      %v1979 = vlaneseq
      %v1980 = vshrl.u32 %v1979, 7
      %v1981 = vsub.s32 %v1978, %v1980
      %v1982 = vrot.slane %v1954, %v1981
      %v1983 = vcombine.high %v1961, %v1961
      %v1984 = vcombine.high %v1968, %v1968
      %v1985 = vcombine.high %v1975, %v1975
      %v1986 = vcombine.high %v1982, %v1982
      %v1988 = vunpack.c.l.s4 1966171168
      %v1989 = vunpack.c.0.s8 %v1988
      %v1990 = vlaneseq
      %v1991 = vshrl.u32 %v1990, 7
      %v1992 = vsub.s32 %v1989, %v1991
      %v1993 = vrot.slane %v1686, %v1992
      %v1994 = vcombine.high %v1993, %v1993
      %v1996 = vunpack.c.l.s4 1966171168
      %v1997 = vunpack.c.0.s8 %v1996
      %v1998 = vlaneseq
      %v1999 = vshrl.u32 %v1998, 7
      %v2000 = vsub.s32 %v1997, %v1999
      %v2001 = vrot.slane %v1993, %v2000
      %v2003 = vunpack.c.l.s4 1966171168
      %v2004 = vunpack.c.0.s8 %v2003
      %v2005 = vlaneseq
      %v2006 = vshrl.u32 %v2005, 7
      %v2007 = vsub.s32 %v2004, %v2006
      %v2008 = vrot.slane %v1994, %v2007
      %v2009 = vcombine.high %v2001, %v2001
      %v2010 = vcombine.low %v1717, %v1731
      %v2012 = vunpack.c.l.s4 1966171168
      %v2013 = vunpack.c.0.s8 %v2012
      %v2014 = vlaneseq
      %v2015 = vshrl.u32 %v2014, 7
      %v2016 = vsub.s32 %v2013, %v2015
      %v2017 = vrot.slane %v2010, %v2016
      %v2019 = vunpack.c.l.s4 1966171168
      %v2020 = vunpack.c.0.s8 %v2019
      %v2021 = vlaneseq
      %v2022 = vshrl.u32 %v2021, 7
      %v2023 = vsub.s32 %v2020, %v2022
      %v2024 = vrot.slane %v2017, %v2023
      %v2025 = vcombine.low %v1739, %v1741
      %v2027 = vunpack.c.l.s4 1966171168
      %v2028 = vunpack.c.0.s8 %v2027
      %v2029 = vlaneseq
      %v2030 = vshrl.u32 %v2029, 7
      %v2031 = vsub.s32 %v2028, %v2030
      %v2032 = vrot.slane %v2025, %v2031
      %v2034 = vunpack.c.l.s4 1966171168
      %v2035 = vunpack.c.0.s8 %v2034
      %v2036 = vlaneseq
      %v2037 = vshrl.u32 %v2036, 7
      %v2038 = vsub.s32 %v2035, %v2037
      %v2039 = vrot.slane %v2032, %v2038
      %v2040 = vcombine.low %v1724, %v1738
      %v2042 = vunpack.c.l.s4 1966171168
      %v2043 = vunpack.c.0.s8 %v2042
      %v2044 = vlaneseq
      %v2045 = vshrl.u32 %v2044, 7
      %v2046 = vsub.s32 %v2043, %v2045
      %v2047 = vrot.slane %v2040, %v2046
      %v2049 = vunpack.c.l.s4 1966171168
      %v2050 = vunpack.c.0.s8 %v2049
      %v2051 = vlaneseq
      %v2052 = vshrl.u32 %v2051, 7
      %v2053 = vsub.s32 %v2050, %v2052
      %v2054 = vrot.slane %v2047, %v2053
      %v2055 = vcombine.low %v1740, %v1742
      %v2057 = vunpack.c.l.s4 1966171168
      %v2058 = vunpack.c.0.s8 %v2057
      %v2059 = vlaneseq
      %v2060 = vshrl.u32 %v2059, 7
      %v2061 = vsub.s32 %v2058, %v2060
      %v2062 = vrot.slane %v2055, %v2061
      %v2064 = vunpack.c.l.s4 1966171168
      %v2065 = vunpack.c.0.s8 %v2064
      %v2066 = vlaneseq
      %v2067 = vshrl.u32 %v2066, 7
      %v2068 = vsub.s32 %v2065, %v2067
      %v2069 = vrot.slane %v2062, %v2068
      %v2070 = vcombine.low %v1766, %v1780
      %v2072 = vunpack.c.l.s4 1966171168
      %v2073 = vunpack.c.0.s8 %v2072
      %v2074 = vlaneseq
      %v2075 = vshrl.u32 %v2074, 7
      %v2076 = vsub.s32 %v2073, %v2075
      %v2077 = vrot.slane %v2070, %v2076
      %v2079 = vunpack.c.l.s4 1966171168
      %v2080 = vunpack.c.0.s8 %v2079
      %v2081 = vlaneseq
      %v2082 = vshrl.u32 %v2081, 7
      %v2083 = vsub.s32 %v2080, %v2082
      %v2084 = vrot.slane %v2077, %v2083
      %v2085 = vcombine.low %v1788, %v1790
      %v2087 = vunpack.c.l.s4 1966171168
      %v2088 = vunpack.c.0.s8 %v2087
      %v2089 = vlaneseq
      %v2090 = vshrl.u32 %v2089, 7
      %v2091 = vsub.s32 %v2088, %v2090
      %v2092 = vrot.slane %v2085, %v2091
      %v2094 = vunpack.c.l.s4 1966171168
      %v2095 = vunpack.c.0.s8 %v2094
      %v2096 = vlaneseq
      %v2097 = vshrl.u32 %v2096, 7
      %v2098 = vsub.s32 %v2095, %v2097
      %v2099 = vrot.slane %v2092, %v2098
      %v2100 = vcombine.low %v1787, %v1789
      %v2102 = vunpack.c.l.s4 1966171168
      %v2103 = vunpack.c.0.s8 %v2102
      %v2104 = vlaneseq
      %v2105 = vshrl.u32 %v2104, 7
      %v2106 = vsub.s32 %v2103, %v2105
      %v2107 = vrot.slane %v2100, %v2106
      %v2109 = vunpack.c.l.s4 1966171168
      %v2110 = vunpack.c.0.s8 %v2109
      %v2111 = vlaneseq
      %v2112 = vshrl.u32 %v2111, 7
      %v2113 = vsub.s32 %v2110, %v2112
      %v2114 = vrot.slane %v2107, %v2113
      %v2115 = vcombine.low %v1791, %v1815
      %v2117 = vunpack.c.l.s4 1966171168
      %v2118 = vunpack.c.0.s8 %v2117
      %v2119 = vlaneseq
      %v2120 = vshrl.u32 %v2119, 7
      %v2121 = vsub.s32 %v2118, %v2120
      %v2122 = vrot.slane %v2115, %v2121
      %v2124 = vunpack.c.l.s4 1966171168
      %v2125 = vunpack.c.0.s8 %v2124
      %v2126 = vlaneseq
      %v2127 = vshrl.u32 %v2126, 7
      %v2128 = vsub.s32 %v2125, %v2127
      %v2129 = vrot.slane %v2122, %v2128
      %v2130 = vcombine.low %v1829, %v1837
      %v2132 = vunpack.c.l.s4 1966171168
      %v2133 = vunpack.c.0.s8 %v2132
      %v2134 = vlaneseq
      %v2135 = vshrl.u32 %v2134, 7
      %v2136 = vsub.s32 %v2133, %v2135
      %v2137 = vrot.slane %v2130, %v2136
      %v2139 = vunpack.c.l.s4 1966171168
      %v2140 = vunpack.c.0.s8 %v2139
      %v2141 = vlaneseq
      %v2142 = vshrl.u32 %v2141, 7
      %v2143 = vsub.s32 %v2140, %v2142
      %v2144 = vrot.slane %v2137, %v2143
      %v2145 = vcombine.low %v1839, %v1822
      %v2147 = vunpack.c.l.s4 1966171168
      %v2148 = vunpack.c.0.s8 %v2147
      %v2149 = vlaneseq
      %v2150 = vshrl.u32 %v2149, 7
      %v2151 = vsub.s32 %v2148, %v2150
      %v2152 = vrot.slane %v2145, %v2151
      %v2154 = vunpack.c.l.s4 1966171168
      %v2155 = vunpack.c.0.s8 %v2154
      %v2156 = vlaneseq
      %v2157 = vshrl.u32 %v2156, 7
      %v2158 = vsub.s32 %v2155, %v2157
      %v2159 = vrot.slane %v2152, %v2158
      %v2160 = vcombine.low %v1836, %v1838
      %v2162 = vunpack.c.l.s4 1966171168
      %v2163 = vunpack.c.0.s8 %v2162
      %v2164 = vlaneseq
      %v2165 = vshrl.u32 %v2164, 7
      %v2166 = vsub.s32 %v2163, %v2165
      %v2167 = vrot.slane %v2160, %v2166
      %v2169 = vunpack.c.l.s4 1966171168
      %v2170 = vunpack.c.0.s8 %v2169
      %v2171 = vlaneseq
      %v2172 = vshrl.u32 %v2171, 7
      %v2173 = vsub.s32 %v2170, %v2172
      %v2174 = vrot.slane %v2167, %v2173
      %v2175 = vcombine.low %v1840, %v1864
      %v2177 = vunpack.c.l.s4 1966171168
      %v2178 = vunpack.c.0.s8 %v2177
      %v2179 = vlaneseq
      %v2180 = vshrl.u32 %v2179, 7
      %v2181 = vsub.s32 %v2178, %v2180
      %v2182 = vrot.slane %v2175, %v2181
      %v2184 = vunpack.c.l.s4 1966171168
      %v2185 = vunpack.c.0.s8 %v2184
      %v2186 = vlaneseq
      %v2187 = vshrl.u32 %v2186, 7
      %v2188 = vsub.s32 %v2185, %v2187
      %v2189 = vrot.slane %v2182, %v2188
      %v2190 = vcombine.low %v1886, %v1888
      %v2192 = vunpack.c.l.s4 1966171168
      %v2193 = vunpack.c.0.s8 %v2192
      %v2194 = vlaneseq
      %v2195 = vshrl.u32 %v2194, 7
      %v2196 = vsub.s32 %v2193, %v2195
      %v2197 = vrot.slane %v2190, %v2196
      %v2199 = vunpack.c.l.s4 1966171168
      %v2200 = vunpack.c.0.s8 %v2199
      %v2201 = vlaneseq
      %v2202 = vshrl.u32 %v2201, 7
      %v2203 = vsub.s32 %v2200, %v2202
      %v2204 = vrot.slane %v2197, %v2203
      %v2205 = vcombine.low %v1871, %v1885
      %v2207 = vunpack.c.l.s4 1966171168
      %v2208 = vunpack.c.0.s8 %v2207
      %v2209 = vlaneseq
      %v2210 = vshrl.u32 %v2209, 7
      %v2211 = vsub.s32 %v2208, %v2210
      %v2212 = vrot.slane %v2205, %v2211
      %v2214 = vunpack.c.l.s4 1966171168
      %v2215 = vunpack.c.0.s8 %v2214
      %v2216 = vlaneseq
      %v2217 = vshrl.u32 %v2216, 7
      %v2218 = vsub.s32 %v2215, %v2217
      %v2219 = vrot.slane %v2212, %v2218
      %v2220 = vcombine.low %v1887, %v1889
      %v2222 = vunpack.c.l.s4 1966171168
      %v2223 = vunpack.c.0.s8 %v2222
      %v2224 = vlaneseq
      %v2225 = vshrl.u32 %v2224, 7
      %v2226 = vsub.s32 %v2223, %v2225
      %v2227 = vrot.slane %v2220, %v2226
      %v2229 = vunpack.c.l.s4 1966171168
      %v2230 = vunpack.c.0.s8 %v2229
      %v2231 = vlaneseq
      %v2232 = vshrl.u32 %v2231, 7
      %v2233 = vsub.s32 %v2230, %v2232
      %v2234 = vrot.slane %v2227, %v2233
      %v2235 = vcombine.low %v1913, %v1927
      %v2237 = vunpack.c.l.s4 1966171168
      %v2238 = vunpack.c.0.s8 %v2237
      %v2239 = vlaneseq
      %v2240 = vshrl.u32 %v2239, 7
      %v2241 = vsub.s32 %v2238, %v2240
      %v2242 = vrot.slane %v2235, %v2241
      %v2244 = vunpack.c.l.s4 1966171168
      %v2245 = vunpack.c.0.s8 %v2244
      %v2246 = vlaneseq
      %v2247 = vshrl.u32 %v2246, 7
      %v2248 = vsub.s32 %v2245, %v2247
      %v2249 = vrot.slane %v2242, %v2248
      %v2250 = vcombine.low %v1935, %v1936
      %v2252 = vunpack.c.l.s4 1966171168
      %v2253 = vunpack.c.0.s8 %v2252
      %v2254 = vlaneseq
      %v2255 = vshrl.u32 %v2254, 7
      %v2256 = vsub.s32 %v2253, %v2255
      %v2257 = vrot.slane %v2250, %v2256
      %v2259 = vunpack.c.l.s4 1966171168
      %v2260 = vunpack.c.0.s8 %v2259
      %v2261 = vlaneseq
      %v2262 = vshrl.u32 %v2261, 7
      %v2263 = vsub.s32 %v2260, %v2262
      %v2264 = vrot.slane %v2257, %v2263
      %v2265 = vcombine.low %v1920, %v1934
      %v2267 = vunpack.c.l.s4 1966171168
      %v2268 = vunpack.c.0.s8 %v2267
      %v2269 = vlaneseq
      %v2270 = vshrl.u32 %v2269, 7
      %v2271 = vsub.s32 %v2268, %v2270
      %v2272 = vrot.slane %v2265, %v2271
      %v2274 = vunpack.c.l.s4 1966171168
      %v2275 = vunpack.c.0.s8 %v2274
      %v2276 = vlaneseq
      %v2277 = vshrl.u32 %v2276, 7
      %v2278 = vsub.s32 %v2275, %v2277
      %v2279 = vrot.slane %v2272, %v2278
      %v2280 = vcombine.low %v1937, %v1961
      %v2282 = vunpack.c.l.s4 1966171168
      %v2283 = vunpack.c.0.s8 %v2282
      %v2284 = vlaneseq
      %v2285 = vshrl.u32 %v2284, 7
      %v2286 = vsub.s32 %v2283, %v2285
      %v2287 = vrot.slane %v2280, %v2286
      %v2289 = vunpack.c.l.s4 1966171168
      %v2290 = vunpack.c.0.s8 %v2289
      %v2291 = vlaneseq
      %v2292 = vshrl.u32 %v2291, 7
      %v2293 = vsub.s32 %v2290, %v2292
      %v2294 = vrot.slane %v2287, %v2293
      %v2295 = vcombine.low %v1975, %v1983
      %v2297 = vunpack.c.l.s4 1966171168
      %v2298 = vunpack.c.0.s8 %v2297
      %v2299 = vlaneseq
      %v2300 = vshrl.u32 %v2299, 7
      %v2301 = vsub.s32 %v2298, %v2300
      %v2302 = vrot.slane %v2295, %v2301
      %v2304 = vunpack.c.l.s4 1966171168
      %v2305 = vunpack.c.0.s8 %v2304
      %v2306 = vlaneseq
      %v2307 = vshrl.u32 %v2306, 7
      %v2308 = vsub.s32 %v2305, %v2307
      %v2309 = vrot.slane %v2302, %v2308
      %v2310 = vcombine.low %v1985, %v1968
      %v2312 = vunpack.c.l.s4 1966171168
      %v2313 = vunpack.c.0.s8 %v2312
      %v2314 = vlaneseq
      %v2315 = vshrl.u32 %v2314, 7
      %v2316 = vsub.s32 %v2313, %v2315
      %v2317 = vrot.slane %v2310, %v2316
      %v2319 = vunpack.c.l.s4 1966171168
      %v2320 = vunpack.c.0.s8 %v2319
      %v2321 = vlaneseq
      %v2322 = vshrl.u32 %v2321, 7
      %v2323 = vsub.s32 %v2320, %v2322
      %v2324 = vrot.slane %v2317, %v2323
      %v2325 = vcombine.low %v1982, %v1984
      %v2327 = vunpack.c.l.s4 1966171168
      %v2328 = vunpack.c.0.s8 %v2327
      %v2329 = vlaneseq
      %v2330 = vshrl.u32 %v2329, 7
      %v2331 = vsub.s32 %v2328, %v2330
      %v2332 = vrot.slane %v2325, %v2331
      %v2334 = vunpack.c.l.s4 1966171168
      %v2335 = vunpack.c.0.s8 %v2334
      %v2336 = vlaneseq
      %v2337 = vshrl.u32 %v2336, 7
      %v2338 = vsub.s32 %v2335, %v2337
      %v2339 = vrot.slane %v2332, %v2338
      %v2340 = vcombine.low %v1986, %v2001
      %v2342 = vunpack.c.l.s4 1966171168
      %v2343 = vunpack.c.0.s8 %v2342
      %v2344 = vlaneseq
      %v2345 = vshrl.u32 %v2344, 7
      %v2346 = vsub.s32 %v2343, %v2345
      %v2347 = vrot.slane %v2340, %v2346
      %v2349 = vunpack.c.l.s4 1966171168
      %v2350 = vunpack.c.0.s8 %v2349
      %v2351 = vlaneseq
      %v2352 = vshrl.u32 %v2351, 7
      %v2353 = vsub.s32 %v2350, %v2352
      %v2354 = vrot.slane %v2347, %v2353
      %v2355 = vcombine.low %v2008, %v2009
      %v2357 = vunpack.c.l.s4 1966171168
      %v2358 = vunpack.c.0.s8 %v2357
      %v2359 = vlaneseq
      %v2360 = vshrl.u32 %v2359, 7
      %v2361 = vsub.s32 %v2358, %v2360
      %v2362 = vrot.slane %v2355, %v2361
      %v2364 = vunpack.c.l.s4 1966171168
      %v2365 = vunpack.c.0.s8 %v2364
      %v2366 = vlaneseq
      %v2367 = vshrl.u32 %v2366, 7
      %v2368 = vsub.s32 %v2365, %v2367
      %v2369 = vrot.slane %v2362, %v2368
      %vm2394 = vcmask 123904
      %v2395 = vsel %vm2394, %v2024, -inf
      %v2396 = vsel %vm2394, %v2114, -inf
      %v2397 = vmax.f32 %v2395, %v2396
      %v2398 = vrot.slane %v2397, 4
      %v2399 = vmax.f32 %v2397, %v2398
      %v2400 = vrot.slane %v2399, 2
      %v2401 = vmax.f32 %v2399, %v2400
      %v2402 = vrot.slane %v2401, 1
      %v2403 = vmax.f32 %v2401, %v2402
      %v2404 = vsel %vm2394, %v2039, -inf
      %v2405 = vsel %vm2394, %v2129, -inf
      %v2406 = vmax.f32 %v2404, %v2405
      %v2407 = vrot.slane %v2406, 4
      %v2408 = vmax.f32 %v2406, %v2407
      %v2409 = vrot.slane %v2408, 2
      %v2410 = vmax.f32 %v2408, %v2409
      %v2411 = vrot.slane %v2410, 1
      %v2412 = vmax.f32 %v2410, %v2411
      %v2413 = vsel %vm2394, %v2054, -inf
      %v2414 = vsel %vm2394, %v2144, -inf
      %v2415 = vmax.f32 %v2413, %v2414
      %v2416 = vrot.slane %v2415, 4
      %v2417 = vmax.f32 %v2415, %v2416
      %v2418 = vrot.slane %v2417, 2
      %v2419 = vmax.f32 %v2417, %v2418
      %v2420 = vrot.slane %v2419, 1
      %v2421 = vmax.f32 %v2419, %v2420
      %v2422 = vsel %vm2394, %v2069, -inf
      %v2423 = vsel %vm2394, %v2159, -inf
      %v2424 = vmax.f32 %v2422, %v2423
      %v2425 = vrot.slane %v2424, 4
      %v2426 = vmax.f32 %v2424, %v2425
      %v2427 = vrot.slane %v2426, 2
      %v2428 = vmax.f32 %v2426, %v2427
      %v2429 = vrot.slane %v2428, 1
      %v2430 = vmax.f32 %v2428, %v2429
      %v2431 = vsel %vm2394, %v2084, -inf
      %v2432 = vsel %vm2394, %v2174, -inf
      %v2433 = vmax.f32 %v2431, %v2432
      %v2434 = vrot.slane %v2433, 4
      %v2435 = vmax.f32 %v2433, %v2434
      %v2436 = vrot.slane %v2435, 2
      %v2437 = vmax.f32 %v2435, %v2436
      %v2438 = vrot.slane %v2437, 1
      %v2439 = vmax.f32 %v2437, %v2438
      %v2440 = vsel %vm2394, %v2099, -inf
      %v2441 = vsel %vm2394, %v2189, -inf
      %v2442 = vmax.f32 %v2440, %v2441
      %v2443 = vrot.slane %v2442, 4
      %v2444 = vmax.f32 %v2442, %v2443
      %v2445 = vrot.slane %v2444, 2
      %v2446 = vmax.f32 %v2444, %v2445
      %v2447 = vrot.slane %v2446, 1
      %v2448 = vmax.f32 %v2446, %v2447
      %v2449 = vsel %vm2394, %v2204, -inf
      %v2450 = vsel %vm2394, %v2294, -inf
      %v2451 = vmax.f32 %v2449, %v2450
      %v2452 = vrot.slane %v2451, 4
      %v2453 = vmax.f32 %v2451, %v2452
      %v2454 = vrot.slane %v2453, 2
      %v2455 = vmax.f32 %v2453, %v2454
      %v2456 = vrot.slane %v2455, 1
      %v2457 = vmax.f32 %v2455, %v2456
      %v2458 = vsel %vm2394, %v2219, -inf
      %v2459 = vsel %vm2394, %v2309, -inf
      %v2460 = vmax.f32 %v2458, %v2459
      %v2461 = vrot.slane %v2460, 4
      %v2462 = vmax.f32 %v2460, %v2461
      %v2463 = vrot.slane %v2462, 2
      %v2464 = vmax.f32 %v2462, %v2463
      %v2465 = vrot.slane %v2464, 1
      %v2466 = vmax.f32 %v2464, %v2465
      %v2467 = vsel %vm2394, %v2234, -inf
      %v2468 = vsel %vm2394, %v2324, -inf
      %v2469 = vmax.f32 %v2467, %v2468
      %v2470 = vrot.slane %v2469, 4
      %v2471 = vmax.f32 %v2469, %v2470
      %v2472 = vrot.slane %v2471, 2
      %v2473 = vmax.f32 %v2471, %v2472
      %v2474 = vrot.slane %v2473, 1
      %v2475 = vmax.f32 %v2473, %v2474
      %v2476 = vsel %vm2394, %v2249, -inf
      %v2477 = vsel %vm2394, %v2339, -inf
      %v2478 = vmax.f32 %v2476, %v2477
      %v2479 = vrot.slane %v2478, 4
      %v2480 = vmax.f32 %v2478, %v2479
      %v2481 = vrot.slane %v2480, 2
      %v2482 = vmax.f32 %v2480, %v2481
      %v2483 = vrot.slane %v2482, 1
      %v2484 = vmax.f32 %v2482, %v2483
      %v2485 = vsel %vm2394, %v2264, -inf
      %v2486 = vsel %vm2394, %v2354, -inf
      %v2487 = vmax.f32 %v2485, %v2486
      %v2488 = vrot.slane %v2487, 4
      %v2489 = vmax.f32 %v2487, %v2488
      %v2490 = vrot.slane %v2489, 2
      %v2491 = vmax.f32 %v2489, %v2490
      %v2492 = vrot.slane %v2491, 1
      %v2493 = vmax.f32 %v2491, %v2492
      %v2494 = vsel %vm2394, %v2279, -inf
      %v2495 = vsel %vm2394, %v2369, -inf
      %v2496 = vmax.f32 %v2494, %v2495
      %v2497 = vrot.slane %v2496, 4
      %v2498 = vmax.f32 %v2496, %v2497
      %v2499 = vrot.slane %v2498, 2
      %v2500 = vmax.f32 %v2498, %v2499
      %v2501 = vrot.slane %v2500, 1
      %v2502 = vmax.f32 %v2500, %v2501
      %v2503 = vpack.c.bf16 %v2403, %v2403
      %v2504 = vpack.c.bf16 %v2412, %v2412
      %v2505 = vpack.c.bf16 %v2421, %v2421
      %v2506 = vpack.c.bf16 %v2430, %v2430
      %v2507 = vpack.c.bf16 %v2439, %v2439
      %v2508 = vpack.c.bf16 %v2448, %v2448
      %v2509 = vpack.c.bf16 %v2457, %v2457
      %v2510 = vpack.c.bf16 %v2466, %v2466
      %v2511 = vpack.c.bf16 %v2475, %v2475
      %v2512 = vpack.c.bf16 %v2484, %v2484
      %v2513 = vpack.c.bf16 %v2493, %v2493
      %v2514 = vpack.c.bf16 %v2502, %v2502
      %v2527 = vunpack.c.l.b16 %v2503
      %v2528 = vunpack.c.l.b16 %v2504
      %v2529 = vunpack.c.l.b16 %v2505
      %v2530 = vunpack.c.l.b16 %v2506
      %v2531 = vunpack.c.l.b16 %v2507
      %v2532 = vunpack.c.l.b16 %v2508
      %v2533 = vunpack.c.l.b16 %v2509
      %v2534 = vunpack.c.l.b16 %v2510
      %v2535 = vunpack.c.l.b16 %v2511
      %v2536 = vunpack.c.l.b16 %v2512
      %v2537 = vunpack.c.l.b16 %v2513
      %v2538 = vunpack.c.l.b16 %v2514
      %v2539 = vpack.c.b16 %v2527, %v2527
      %v2540 = vpack.c.b16 %v2528, %v2528
      %v2541 = vpack.c.b16 %v2529, %v2529
      %v2542 = vpack.c.b16 %v2530, %v2530
      %v2543 = vpack.c.b16 %v2531, %v2531
      %v2544 = vpack.c.b16 %v2532, %v2532
      %v2545 = vpack.c.b16 %v2533, %v2533
      %v2546 = vpack.c.b16 %v2534, %v2534
      %v2547 = vpack.c.b16 %v2535, %v2535
      %v2548 = vpack.c.b16 %v2536, %v2536
      %v2549 = vpack.c.b16 %v2537, %v2537
      %v2550 = vpack.c.b16 %v2538, %v2538
      %v2551 = vunpack.c.l.b16 %v2539
      %v2552 = vunpack.c.l.b16 %v2540
      %v2553 = vunpack.c.l.b16 %v2541
      %v2554 = vunpack.c.l.b16 %v2542
      %v2555 = vunpack.c.l.b16 %v2543
      %v2556 = vunpack.c.l.b16 %v2544
      %v2557 = vunpack.c.l.b16 %v2545
      %v2558 = vunpack.c.l.b16 %v2546
      %v2559 = vunpack.c.l.b16 %v2547
      %v2560 = vunpack.c.l.b16 %v2548
      %v2561 = vunpack.c.l.b16 %v2549
      %v2562 = vunpack.c.l.b16 %v2550
      %vm2563 = vcmask 1041409
      %v2564 = vsel %vm2563, %v2552, %v2551
      %vm2565 = vcmask 1042434
      %v2566 = vsel %vm2565, %v2553, %v2564
      %vm2567 = vcmask 1043459
      %v2568 = vsel %vm2567, %v2554, %v2566
      %vm2569 = vcmask 1044484
      %v2570 = vsel %vm2569, %v2555, %v2568
      %vm2571 = vcmask 1045509
      %v2572 = vsel %vm2571, %v2556, %v2570
      %v2573 = vsel %vm2563, %v2558, %v2557
      %v2574 = vsel %vm2565, %v2559, %v2573
      %v2575 = vsel %vm2567, %v2560, %v2574
      %v2576 = vsel %vm2569, %v2561, %v2575
      %v2577 = vsel %vm2571, %v2562, %v2576
      %v2578 = vpack.c.b16 %v2572, %v2572
      %v2579 = vpack.c.b16 %v2577, %v2577
      %vm2582 = vcmask 124928
      %2583 = vst.msk [vmem:[%s316] sm:$0x7] %vm2582, %v2578
      %2584 = vst.msk [vmem:[%s316 + $0x4] sm:$0x7] %vm2582, %v2579
      %s2585 = smul.u32 2, %s20
      %p2586 = scmp.lt.s32.totalorder %s19, 1
      %s2587 = scalar_select %p2586, %s19, 1
      %p2588 = scmp.lt.s32.totalorder %s2585, 7
      %s2589 = scalar_select %p2588, %s2585, 7
      %s2590 = smul.addr %s2587, 8
      %s2591 = sadd.s32 %s2589, %s2590
      %s2592 = smul.addr %s2591, 4
      %s2593 = scalar_lea.vmem %s4, %s2592
      // Predicated region
      $region37: #{tpu_custom_call.1} parent=35 // pred_check
        %p2594 = pneg %p149
      $region38: #{tpu_custom_call.1} parent=35 // pred_check_branch
        %2596 = sbr.rel (%p2594) target = $region40
      $region39: #{tpu_custom_call.1} parent=35 // pred_region
        %s2597 = smul.u32 2, %s20
      $region40: #{tpu_custom_call.1} parent=35 // pred_fallthru
        _
    $region36: #{tpu_custom_call.1} parent=5 // pred_fallthru
      _
    %p2598 = scmp.le.s32.totalorder 2, %s10
    // Predicated region
    $region41: #{tpu_custom_call.1} parent=5 // pred_check
      %p2599 = pneg %p2598
    $region42: #{tpu_custom_call.1} parent=5 // pred_check_branch
      %2601 = sbr.rel (%p2599) target = $region44
    $region43: #{tpu_custom_call.1} parent=5 // pred_region
      %s2602 = ssub.s32 %s10, 2
      // Predicated region
      $region45: #{tpu_custom_call.1} parent=43 // pred_check
        %p2603 = pneg %p155
      $region46: #{tpu_custom_call.1} parent=43 // pred_check_branch
        %2605 = sbr.rel (%p2603) target = $region48
      $region47: #{tpu_custom_call.1} parent=43 // pred_region
        %s2606 = smul.u32 2, %s22
        %p2607 = scmp.lt.s32.totalorder %s21, 1
        %s2608 = scalar_select %p2607, %s21, 1
        %p2609 = scmp.lt.s32.totalorder %s2606, 7
        %s2610 = scalar_select %p2609, %s2606, 7
        %s2611 = smul.addr %s2608, 8
        %s2612 = sadd.s32 %s2610, %s2611
        %s2613 = smul.addr %s2612, 4
        %s2614 = scalar_lea.vmem %s4, %s2613
      $region48: #{tpu_custom_call.1} parent=43 // pred_fallthru
        _
    $region44: #{tpu_custom_call.1} parent=5 // pred_fallthru
      _
  $region6: #{tpu_custom_call.1} parent=0 // loop_footer
    %s14 = sadd.s32 1, %s10
  $region7: #{tpu_custom_call.1} parent=0 // loop_footer_branch
    %9 = sbr.rel target = $region3
  $region8: #{tpu_custom_call.1} parent=0 // loop_exit
    _

</llo_original>
